<compile_context>
chip_gen: v6e
topology: v6e:2x2x1
jax: 0.10.0
libtpu: 0.0.40
codegen_flags: <defaults>
</compile_context>

<pallas_src>
import functools

import jax
import jax.numpy as jnp
from jax import lax
from jax.experimental import pallas as pl
from jax.experimental.pallas import tpu as pltpu

EPS = 1e-5


def _fused_kernel(xa_ref, xb_ref, w_ref, gb_ref, o_ref, *, inv_p):
    # xa_ref, xb_ref: (C_in, P)       f32   (P = N*H*W = 196, no padding)
    # w_ref:          (TC_OUT, C_in)  bf16
    # gb_ref:         (TC_OUT, 2)     f32   (col 0 = gamma, col 1 = beta)
    # o_ref:          (TC_OUT, P)     f32
    x = (xa_ref[...] + xb_ref[...]).astype(jnp.bfloat16)              # add (x226 + x211)
    y = jnp.dot(w_ref[...], x, preferred_element_type=jnp.float32)    # 1x1 conv on the MXU

    # Single-pass batch statistics over the full spatial axis (exact: no padded columns).
    s1 = jnp.sum(y, axis=1, keepdims=True)                            # (TC_OUT, 1)
    s2 = jnp.sum(y * y, axis=1, keepdims=True)                        # (TC_OUT, 1)
    mean = s1 * inv_p
    var = jnp.maximum(s2 * inv_p - mean * mean, 0.0)                  # clamp f32 cancellation

    # Fold BN affine into per-channel scale/shift -> one mul + one add per element.
    gamma = gb_ref[:, 0:1]
    beta = gb_ref[:, 1:2]
    scale = gamma * lax.rsqrt(var + EPS)                              # (TC_OUT, 1)
    shift = beta - mean * scale                                       # (TC_OUT, 1)
    o_ref[...] = y * scale + shift


def _pick_n_tiles(c_out):
    """Device-aware C_out tiling: 1 tile on v5e (1 TC, 128-wide MXU), 2 elsewhere."""
    try:
        kind = jax.devices()[0].device_kind.lower()
    except Exception:
        kind = ""
    if "v5 lite" in kind or "v5e" in kind or "v5litepod" in kind:
        return 1
    if c_out % 2 == 0 and (c_out // 2) % 8 == 0:
        return 2                                                       # 2 x 408 for C_out=816
    return 1


def prepare_params(weight, gamma, beta):
    """One-time parameter prep (hoist out of the hot path for repeated calls)."""
    C_out, C_in = weight.shape[0], weight.shape[1]
    w2d = weight.reshape(C_out, C_in).astype(jnp.bfloat16)            # (C_out, C_in) bf16
    gb = jnp.stack([gamma, beta], axis=1).astype(jnp.float32)         # (C_out, 2)
    return w2d, gb


def fused_add_conv1x1_bn(x226, x211, w2d, gb):
    """x226, x211: NCHW float32; w2d: (C_out, C_in) bf16; gb: (C_out, 2) f32."""
    N, C_in, H, W = x226.shape
    C_out = w2d.shape[0]
    P = N * H * W                                                      # 196 (no padding)

    # Flatten NCHW -> (C_in, P).  For N=1 these are layout-trivial reshapes.
    xa = x226.reshape(N, C_in, H * W).transpose(1, 0, 2).reshape(C_in, P)
    xb = x211.reshape(N, C_in, H * W).transpose(1, 0, 2).reshape(C_in, P)

    n_tiles = _pick_n_tiles(C_out)
    tc_out = C_out // n_tiles

    kernel = functools.partial(_fused_kernel, inv_p=1.0 / float(P))

    cost = pl.CostEstimate(
        flops=2 * C_out * C_in * P,
        transcendentals=0,
        bytes_accessed=(2 * C_in * P * 4 + C_out * C_in * 2 + C_out * 2 * 4
                        + C_out * P * 4),
    )

    out_flat = pl.pallas_call(
        kernel,
        out_shape=jax.ShapeDtypeStruct((C_out, P), jnp.float32),
        grid=(n_tiles,),
        in_specs=[
            pl.BlockSpec((C_in, P), lambda i: (0, 0)),                 # xa (resident)
            pl.BlockSpec((C_in, P), lambda i: (0, 0)),                 # xb (resident)
            pl.BlockSpec((tc_out, C_in), lambda i: (i, 0)),            # weight tile
            pl.BlockSpec((tc_out, 2), lambda i: (i, 0)),               # gamma|beta tile
        ],
        out_specs=pl.BlockSpec((tc_out, P), lambda i: (i, 0)),
        compiler_params=pltpu.CompilerParams(
            dimension_semantics=("parallel",)),
        cost_estimate=cost,
    )(xa, xb, w2d, gb)

    # (C_out, N*H*W) -> (N, C_out, H, W)
    return out_flat.reshape(C_out, N, H, W).transpose(1, 0, 2, 3)


def reference(x226, x211, weight, gamma, beta):
    """Pure-JAX (f32) reference for correctness check."""
    x = x226 + x211
    N, C_in, H, W = x.shape
    C_out = weight.shape[0]
    w2d = weight.reshape(C_out, C_in)
    xf = x.reshape(N, C_in, H * W).transpose(1, 0, 2).reshape(C_in, -1)
    y = w2d @ xf                                                       # (C_out, N*H*W)
    mean = jnp.mean(y, axis=1, keepdims=True)
    var = jnp.mean((y - mean) ** 2, axis=1, keepdims=True)
    y = (y - mean) / jnp.sqrt(var + EPS)
    y = y * gamma.reshape(-1, 1) + beta.reshape(-1, 1)
    return y.reshape(C_out, N, H, W).transpose(1, 0, 2, 3)


if __name__ == "__main__":
    key = jax.random.PRNGKey(0)
    k1, k2, k3, k4, k5 = jax.random.split(key, 5)

    N, C_in, H, W = 1, 136, 14, 14
    C_out = 816

    x226 = jax.random.normal(k1, (N, C_in, H, W), dtype=jnp.float32)
    x211 = jax.random.normal(k2, (N, C_in, H, W), dtype=jnp.float32)

    # Deterministic parameter init (synthetic, not a checkpoint load)
    weight = jax.random.normal(k3, (C_out, C_in, 1, 1), dtype=jnp.float32) * 0.05
    gamma = 1.0 + 0.1 * jax.random.normal(k4, (C_out,), dtype=jnp.float32)
    beta = 0.1 * jax.random.normal(k5, (C_out,), dtype=jnp.float32)

    # One-time parameter prep (cached across calls in a real model).
    w2d, gb = prepare_params(weight, gamma, beta)
    w2d, gb = jax.block_until_ready((w2d, gb))

    out = fused_add_conv1x1_bn(x226, x211, w2d, gb)
    out = jax.block_until_ready(out)

    ref = reference(x226, x211, weight, gamma, beta)
    assert out.shape == (N, C_out, H, W)
    # Tolerance loosened slightly for bf16 MXU operands (f32 accumulation).
    assert jnp.allclose(out, ref, atol=2e-2, rtol=2e-2), "mismatch vs reference"

    print("KERNEL_OK")
</pallas_src>

<mosaic_0001>
module attributes {stable_mosaic.version = 11 : i64} {
  func.func @_fused_kernel(%arg0: i32, %arg1: memref<136x196xf32, #tpu.memory_space<vmem>>, %arg2: memref<136x196xf32, #tpu.memory_space<vmem>>, %arg3: memref<408x136xbf16, #tpu.memory_space<vmem>>, %arg4: memref<408x2xf32, #tpu.memory_space<vmem>>, %arg5: memref<408x196xf32, #tpu.memory_space<vmem>>) attributes {dimension_semantics = [#tpu.dimension_semantics<parallel>], iteration_bounds = array<i64: 2>, scalar_prefetch = 0 : i64, scratch_operands = 0 : i64, tpu.core_type = #tpu.core_type<tc>, window_params = [{pipeline_mode = #tpu.pipeline_mode<synchronous>, transform_indices = @transform_0, window_bounds = array<i64: 136, 196>}, {pipeline_mode = #tpu.pipeline_mode<synchronous>, transform_indices = @transform_1, window_bounds = array<i64: 136, 196>}, {transform_indices = @transform_2, window_bounds = array<i64: 408, 136>}, {transform_indices = @transform_3, window_bounds = array<i64: 408, 2>}, {transform_indices = @transform_4, window_bounds = array<i64: 408, 196>}]} {
    %c0 = arith.constant 0 : index
    %c0_0 = arith.constant 0 : index
    %0 = vector.load %arg1[%c0, %c0_0] : memref<136x196xf32, #tpu.memory_space<vmem>>, vector<136x196xf32>
    %c0_1 = arith.constant 0 : index
    %c0_2 = arith.constant 0 : index
    %1 = vector.load %arg2[%c0_1, %c0_2] : memref<136x196xf32, #tpu.memory_space<vmem>>, vector<136x196xf32>
    %2 = arith.addf %0, %1 : vector<136x196xf32>
    %3 = arith.truncf %2 : vector<136x196xf32> to vector<136x196xbf16>
    %c0_3 = arith.constant 0 : index
    %c0_4 = arith.constant 0 : index
    %4 = vector.load %arg3[%c0_3, %c0_4] : memref<408x136xbf16, #tpu.memory_space<vmem>>, vector<408x136xbf16>
    %cst = arith.constant dense<0.000000e+00> : vector<408x196xf32>
    %5 = tpu.matmul %4, %3, %cst {dimension_numbers = #tpu.dot_dimension_numbers<[1], [0], [0], [1], [0, 0, 1, 1], [], []>} : vector<408x136xbf16>, vector<136x196xbf16>, vector<408x196xf32> -> vector<408x196xf32>
    %cst_5 = arith.constant dense<0.000000e+00> : vector<408xf32>
    %6 = vector.multi_reduction <add>, %5, %cst_5 [1] : vector<408x196xf32> to vector<408xf32>
    %7 = vector.shape_cast %6 : vector<408xf32> to vector<408x1xf32>
    %8 = arith.mulf %5, %5 : vector<408x196xf32>
    %cst_6 = arith.constant dense<0.000000e+00> : vector<408xf32>
    %9 = vector.multi_reduction <add>, %8, %cst_6 [1] : vector<408x196xf32> to vector<408xf32>
    %10 = vector.shape_cast %9 : vector<408xf32> to vector<408x1xf32>
    %cst_7 = arith.constant 0.00510204071 : f32
    %11 = vector.broadcast %cst_7 : f32 to vector<408x1xf32>
    %12 = arith.mulf %7, %11 : vector<408x1xf32>
    %cst_8 = arith.constant 0.00510204071 : f32
    %13 = vector.broadcast %cst_8 : f32 to vector<408x1xf32>
    %14 = arith.mulf %10, %13 : vector<408x1xf32>
    %15 = arith.mulf %12, %12 : vector<408x1xf32>
    %16 = arith.subf %14, %15 : vector<408x1xf32>
    %cst_9 = arith.constant 0.000000e+00 : f32
    %17 = vector.broadcast %cst_9 : f32 to vector<408x1xf32>
    %18 = arith.maximumf %16, %17 : vector<408x1xf32>
    %c0_10 = arith.constant 0 : index
    %c0_11 = arith.constant 0 : index
    %19 = vector.load %arg4[%c0_10, %c0_11] : memref<408x2xf32, #tpu.memory_space<vmem>>, vector<408x1xf32>
    %c0_12 = arith.constant 0 : index
    %c1 = arith.constant 1 : index
    %20 = vector.load %arg4[%c0_12, %c1] : memref<408x2xf32, #tpu.memory_space<vmem>>, vector<408x1xf32>
    %cst_13 = arith.constant 9.99999974E-6 : f32
    %21 = vector.broadcast %cst_13 : f32 to vector<408x1xf32>
    %22 = arith.addf %18, %21 : vector<408x1xf32>
    %23 = math.rsqrt %22 : vector<408x1xf32>
    %24 = arith.mulf %19, %23 : vector<408x1xf32>
    %25 = arith.mulf %12, %24 : vector<408x1xf32>
    %26 = arith.subf %20, %25 : vector<408x1xf32>
    %27 = vector.broadcast %24 : vector<408x1xf32> to vector<408x196xf32>
    %28 = arith.mulf %5, %27 : vector<408x196xf32>
    %29 = vector.broadcast %26 : vector<408x1xf32> to vector<408x196xf32>
    %30 = arith.addf %28, %29 : vector<408x196xf32>
    %c0_14 = arith.constant 0 : index
    %c0_15 = arith.constant 0 : index
    %31 = vector.load %arg5[%c0_14, %c0_15] : memref<408x196xf32, #tpu.memory_space<vmem>>, vector<408x196xf32>
    tpu.vector_store %arg5[%c0_14, %c0_15], %30 {strides = array<i32>} : memref<408x196xf32, #tpu.memory_space<vmem>>, vector<408x196xf32>,
    return
  }
  func.func @transform_0(%arg0: i32) -> (i32, i32) {
    %c0_i32 = arith.constant 0 : i32
    %c0_i32_0 = arith.constant 0 : i32
    %c0_i32_1 = arith.constant 0 : i32
    return %c0_i32, %c0_i32_0 : i32, i32
  }
  func.func @transform_1(%arg0: i32) -> (i32, i32) {
    %c0_i32 = arith.constant 0 : i32
    %c0_i32_0 = arith.constant 0 : i32
    %c0_i32_1 = arith.constant 0 : i32
    return %c0_i32, %c0_i32_0 : i32, i32
  }
  func.func @transform_2(%arg0: i32) -> (i32, i32) {
    %c0_i32 = arith.constant 0 : i32
    %c0_i32_0 = arith.constant 0 : i32
    return %arg0, %c0_i32 : i32, i32
  }
  func.func @transform_3(%arg0: i32) -> (i32, i32) {
    %c0_i32 = arith.constant 0 : i32
    %c0_i32_0 = arith.constant 0 : i32
    return %arg0, %c0_i32 : i32, i32
  }
  func.func @transform_4(%arg0: i32) -> (i32, i32) {
    %c0_i32 = arith.constant 0 : i32
    %c0_i32_0 = arith.constant 0 : i32
    return %arg0, %c0_i32 : i32, i32
  }
}

</mosaic_0001>

<llo_original>
// kernel: tpu_custom_call.1
$region0: #{tpu_custom_call.1}
  #allocation0 [shape = 'u32[]', space=smem, size = 0x4, offset = 0x4, fixed_abs, tag = 'smem constant byte address 0x4 - core index']
  #allocation1 [shape = 'u32[144,128]{1,0:T(1,128)}', space=vmem, size = 0x12000, scoped, tag = 'internal scratch']
  %s0 = inlined_call_operand.vmem [shape: f32[136,196], index: 0, kind: input, shape index: {}]
  %s1 = inlined_call_operand.vmem [shape: f32[136,196], index: 1, kind: input, shape index: {}]
  %s2 = inlined_call_operand.vmem [shape: bf16[816,136], index: 2, kind: input, shape index: {}]
  %s3 = inlined_call_operand.vmem [shape: f32[816,2], index: 3, kind: input, shape index: {}]
  %s4 = inlined_call_operand.vmem [shape: f32[816,196], index: 4, kind: output, shape index: {}]
  %s5 = sld [smem:[#allocation0]]
  $region49: #{tpu_custom_call.1} parent=0
    _
  %s7 = ssub.s32 1, %s5
  %s8 = scalar_select 0, %s7, %s5
  loop: start=0, step=1, limit=4
  $region2: #{tpu_custom_call.1} parent=0 // loop_pre_header
    _
  $region3: #{tpu_custom_call.1} parent=0 // loop_header
    %s10 = sphi 0, %s14
    %p11 = scmp.ge.s32.totalorder %s10, 4
    %s18 = sphi 0, %s18
    %s20 = sphi 0, %s18
    %s21 = sphi 0, %s20
    %s35 = sphi 0, %s21
    %s39 = sphi 0, %s39
    %s41 = sphi 0, %s39
    %s42 = sphi 0, %s41
    %s56 = sphi 0, %s42
    %s62 = sphi 0, %s64
    %s65 = sphi 0, %s62
    %s66 = sphi 0, %s65
    %s82 = sphi 0, %s66
    %s88 = sphi 0, %s90
    %s91 = sphi 0, %s88
    %s92 = sphi 0, %s91
    %s108 = sphi 0, %s92
    %s114 = sphi 0, %s116
    %s117 = sphi 0, %s114
    %s118 = sphi 0, %s117
    %s134 = sphi 0, %s118
  $region4: #{tpu_custom_call.1} parent=0 // loop_header_branch
    %13 = sbr.rel (%p11) target = $region8
  $region5: #{tpu_custom_call.1} parent=0 // loop_body
    %s15 = ssub.s32 %s10, 1
    %s16 = ssub.s32 %s10, 2
    %s17 = sadd.s32 %s10, 1
    %s19 = sadd.s32 %s18, 1
    %p22 = scmp.eq.s32.totalorder %s10, 1
    %p23 = scmp.ne.s32.totalorder %s18, %s20
    %p24 = scmp.eq.s32.totalorder %s10, 0
    %p25 = por %p23, %p24
    %p26 = scmp.ne.s32.totalorder %s18, %s20
    %p27 = scmp.eq.s32.totalorder %s15, 1
    %p28 = por %p26, %p27
    %p29 = scmp.ne.s32.totalorder %s20, %s21
    %p30 = scmp.eq.s32.totalorder %s15, 0
    %p31 = por %p29, %p30
    %p32 = scmp.ne.s32.totalorder %s20, %s21
    %p33 = scmp.eq.s32.totalorder %s16, 1
    %p34 = por %p32, %p33
    %p36 = scmp.ne.s32.totalorder %s21, %s35
    %p37 = scmp.eq.s32.totalorder %s16, 0
    %p38 = por %p36, %p37
    %s40 = sadd.s32 %s39, 1
    %p43 = scmp.eq.s32.totalorder %s10, 1
    %p44 = scmp.ne.s32.totalorder %s39, %s41
    %p45 = scmp.eq.s32.totalorder %s10, 0
    %p46 = por %p44, %p45
    %p47 = scmp.ne.s32.totalorder %s39, %s41
    %p48 = scmp.eq.s32.totalorder %s15, 1
    %p49 = por %p47, %p48
    %p50 = scmp.ne.s32.totalorder %s41, %s42
    %p51 = scmp.eq.s32.totalorder %s15, 0
    %p52 = por %p50, %p51
    %p53 = scmp.ne.s32.totalorder %s41, %s42
    %p54 = scmp.eq.s32.totalorder %s16, 1
    %p55 = por %p53, %p54
    %p57 = scmp.ne.s32.totalorder %s42, %s56
    %p58 = scmp.eq.s32.totalorder %s16, 0
    %p59 = por %p57, %p58
    %s60 = ssub.s32 %s10, %s17
    %p61 = scmp.eq.s32.totalorder %s60, 0
    %s63 = sadd.s32 %s62, 1
    %s64 = scalar_select %p61, %s62, %s63
    %p67 = pneg %p61
    %p68 = scmp.eq.s32.totalorder %s10, 1
    %p69 = por %p67, %p68
    %p70 = scmp.ne.s32.totalorder %s62, %s65
    %p71 = scmp.eq.s32.totalorder %s10, 0
    %p72 = por %p70, %p71
    %p73 = scmp.ne.s32.totalorder %s62, %s65
    %p74 = scmp.eq.s32.totalorder %s15, 1
    %p75 = por %p73, %p74
    %p76 = scmp.ne.s32.totalorder %s65, %s66
    %p77 = scmp.eq.s32.totalorder %s15, 0
    %p78 = por %p76, %p77
    %p79 = scmp.ne.s32.totalorder %s65, %s66
    %p80 = scmp.eq.s32.totalorder %s16, 1
    %p81 = por %p79, %p80
    %p83 = scmp.ne.s32.totalorder %s66, %s82
    %p84 = scmp.eq.s32.totalorder %s16, 0
    %p85 = por %p83, %p84
    %s86 = ssub.s32 %s10, %s17
    %p87 = scmp.eq.s32.totalorder %s86, 0
    %s89 = sadd.s32 %s88, 1
    %s90 = scalar_select %p87, %s88, %s89
    %p93 = pneg %p87
    %p94 = scmp.eq.s32.totalorder %s10, 1
    %p95 = por %p93, %p94
    %p96 = scmp.ne.s32.totalorder %s88, %s91
    %p97 = scmp.eq.s32.totalorder %s10, 0
    %p98 = por %p96, %p97
    %p99 = scmp.ne.s32.totalorder %s88, %s91
    %p100 = scmp.eq.s32.totalorder %s15, 1
    %p101 = por %p99, %p100
    %p102 = scmp.ne.s32.totalorder %s91, %s92
    %p103 = scmp.eq.s32.totalorder %s15, 0
    %p104 = por %p102, %p103
    %p105 = scmp.ne.s32.totalorder %s91, %s92
    %p106 = scmp.eq.s32.totalorder %s16, 1
    %p107 = por %p105, %p106
    %p109 = scmp.ne.s32.totalorder %s92, %s108
    %p110 = scmp.eq.s32.totalorder %s16, 0
    %p111 = por %p109, %p110
    %s112 = ssub.s32 %s10, %s17
    %p113 = scmp.eq.s32.totalorder %s112, 0
    %s115 = sadd.s32 %s114, 1
    %s116 = scalar_select %p113, %s114, %s115
    %p119 = pneg %p113
    %p120 = scmp.eq.s32.totalorder %s10, 1
    %p121 = por %p119, %p120
    %p122 = scmp.ne.s32.totalorder %s114, %s117
    %p123 = scmp.eq.s32.totalorder %s10, 0
    %p124 = por %p122, %p123
    %p125 = scmp.ne.s32.totalorder %s114, %s117
    %p126 = scmp.eq.s32.totalorder %s15, 1
    %p127 = por %p125, %p126
    %p128 = scmp.ne.s32.totalorder %s117, %s118
    %p129 = scmp.eq.s32.totalorder %s15, 0
    %p130 = por %p128, %p129
    %p131 = scmp.ne.s32.totalorder %s117, %s118
    %p132 = scmp.eq.s32.totalorder %s16, 1
    %p133 = por %p131, %p132
    %p135 = scmp.ne.s32.totalorder %s118, %s134
    %p136 = scmp.eq.s32.totalorder %s16, 0
    %p137 = por %p135, %p136
    %p138 = scmp.le.s32.totalorder 1, %s10
    %p139 = scmp.lt.s32.totalorder %s10, 3
    %p140 = pnand %p138, %p139
    %p141 = pneg %p140
    // Predicated region
    $region9: #{tpu_custom_call.1} parent=5 // pred_check
      _
    $region10: #{tpu_custom_call.1} parent=5 // pred_check_branch
      %143 = sbr.rel (%p140) target = $region12
    $region11: #{tpu_custom_call.1} parent=5 // pred_region
      %s144 = ssub.s32 %s10, 1
      // Predicated region
      $region13: #{tpu_custom_call.1} parent=11 // pred_check
        %p145 = pneg %p31
      $region14: #{tpu_custom_call.1} parent=11 // pred_check_branch
        %147 = sbr.rel (%p145) target = $region16
      $region15: #{tpu_custom_call.1} parent=11 // pred_region
        _
      $region16: #{tpu_custom_call.1} parent=11 // pred_fallthru
        _
      // Predicated region
      $region17: #{tpu_custom_call.1} parent=11 // pred_check
        %p148 = pneg %p52
      $region18: #{tpu_custom_call.1} parent=11 // pred_check_branch
        %150 = sbr.rel (%p148) target = $region20
      $region19: #{tpu_custom_call.1} parent=11 // pred_region
        _
      $region20: #{tpu_custom_call.1} parent=11 // pred_fallthru
        _
    $region12: #{tpu_custom_call.1} parent=5 // pred_fallthru
      _
    %p151 = scmp.lt.s32.totalorder %s10, 2
    // Predicated region
    $region21: #{tpu_custom_call.1} parent=5 // pred_check
      %p152 = pneg %p151
    $region22: #{tpu_custom_call.1} parent=5 // pred_check_branch
      %154 = sbr.rel (%p152) target = $region24
    $region23: #{tpu_custom_call.1} parent=5 // pred_region
      // Predicated region
      $region25: #{tpu_custom_call.1} parent=23 // pred_check
        %p155 = pneg %p72
      $region26: #{tpu_custom_call.1} parent=23 // pred_check_branch
        %157 = sbr.rel (%p155) target = $region28
      $region27: #{tpu_custom_call.1} parent=23 // pred_region
        %s158 = smul.u32 51, %s10
        %p159 = scmp.lt.s32.totalorder %s158, 101
        %s160 = scalar_select %p159, %s158, 101
        %s161 = smul.addr %s160, 2
        %s162 = smul.addr %s161, 4
        %s163 = scalar_lea.vmem %s2, %s162
        %s164 = smul.u32 51, %s10
      $region28: #{tpu_custom_call.1} parent=23 // pred_fallthru
        _
      // Predicated region
      $region29: #{tpu_custom_call.1} parent=23 // pred_check
        %p165 = pneg %p98
      $region30: #{tpu_custom_call.1} parent=23 // pred_check_branch
        %167 = sbr.rel (%p165) target = $region32
      $region31: #{tpu_custom_call.1} parent=23 // pred_region
        %s168 = smul.u32 51, %s10
        %p169 = scmp.lt.s32.totalorder %s168, 101
        %s170 = scalar_select %p169, %s168, 101
        %s171 = smul.addr %s170, 8
        %s172 = scalar_lea.vmem %s3, %s171
        %s173 = smul.u32 51, %s10
      $region32: #{tpu_custom_call.1} parent=23 // pred_fallthru
        _
    $region24: #{tpu_custom_call.1} parent=5 // pred_fallthru
      _
    %p174 = scmp.le.s32.totalorder 1, %s10
    %p175 = scmp.lt.s32.totalorder %s10, 3
    %p176 = pnand %p174, %p175
    %p177 = pneg %p176
    // Predicated region
    $region33: #{tpu_custom_call.1} parent=5 // pred_check
      _
    $region34: #{tpu_custom_call.1} parent=5 // pred_check_branch
      %179 = sbr.rel (%p176) target = $region36
    $region35: #{tpu_custom_call.1} parent=5 // pred_region
      %s180 = ssub.s32 %s10, 1
      %p181 = pneg %p31
      %p182 = pneg %p28
      %p183 = pneg %p52
      %p184 = pneg %p49
      %s185 = smul.u32 51, %s15
      %p186 = scmp.lt.s32.totalorder %s185, 101
      %s187 = scalar_select %p186, %s185, 101
      %s188 = smul.addr %s187, 2
      %s189 = smul.addr %s188, 4
      %s190 = scalar_lea.vmem %s2, %s189
      %p191 = pneg %p78
      %p192 = pneg %p75
      %s193 = smul.u32 51, %s15
      %p194 = scmp.lt.s32.totalorder %s193, 101
      %s195 = scalar_select %p194, %s193, 101
      %s196 = smul.addr %s195, 8
      %s197 = scalar_lea.vmem %s3, %s196
      %p198 = pneg %p104
      %p199 = pneg %p101
      %p200 = pneg %p130
      %p201 = pneg %p127
      %s202 = smul.u32 51, %s15
      %p203 = scmp.lt.s32.totalorder %s202, 101
      %s204 = scalar_select %p203, %s202, 101
      %s205 = smul.addr %s204, 2
      %s206 = smul.addr %s205, 8
      %s207 = scalar_lea.vmem %s4, %s206
      %s208 = smul.u32 51, %s15
      %p209 = scmp.lt.s32.totalorder %s208, 101
      %s210 = scalar_select %p209, %s208, 101
      %s211 = smul.addr %s210, 2
      %s212 = smul.addr %s211, 4
      %s213 = scalar_lea.vmem %s2, %s212
      %s214 = smul.u32 51, %s15
      %s215 = smul.u32 51, %s15
      %p216 = scmp.lt.s32.totalorder %s215, 101
      %s217 = scalar_select %p216, %s215, 101
      %s218 = smul.addr %s217, 8
      %s219 = scalar_lea.vmem %s3, %s218
      %s220 = smul.u32 51, %s15
      %s221 = smul.u32 51, %s15
      %p222 = scmp.lt.s32.totalorder %s221, 101
      %s223 = scalar_select %p222, %s221, 101
      %s224 = smul.addr %s223, 2
      %s225 = smul.addr %s224, 8
      %s226 = scalar_lea.vmem %s4, %s225
      %s227 = smul.u32 51, %s15
      %v229 = vld [vmem:[%s0] sm:$0xff]
      %v230 = vld [vmem:[%s0 + $0x8] sm:$0xff]
      %v231 = vld [vmem:[%s0 + $0x10] sm:$0xff]
      %v232 = vld [vmem:[%s0 + $0x18] sm:$0xff]
      %v233 = vld [vmem:[%s0 + $0x20] sm:$0xff]
      %v234 = vld [vmem:[%s0 + $0x28] sm:$0xff]
      %v235 = vld [vmem:[%s0 + $0x30] sm:$0xff]
      %v236 = vld [vmem:[%s0 + $0x38] sm:$0xff]
      %v237 = vld [vmem:[%s0 + $0x40] sm:$0xff]
      %v238 = vld [vmem:[%s0 + $0x48] sm:$0xff]
      %v239 = vld [vmem:[%s0 + $0x50] sm:$0xff]
      %v240 = vld [vmem:[%s0 + $0x58] sm:$0xff]
      %v241 = vld [vmem:[%s0 + $0x60] sm:$0xff]
      %v242 = vld [vmem:[%s0 + $0x68] sm:$0xff]
      %v243 = vld [vmem:[%s0 + $0x70] sm:$0xff]
      %v244 = vld [vmem:[%s0 + $0x78] sm:$0xff]
      %v245 = vld [vmem:[%s0 + $0x80] sm:$0xff]
      %v246 = vld [vmem:[%s0 + $0x88] sm:$0xff]
      %v247 = vld [vmem:[%s0 + $0x90] sm:$0xff]
      %v248 = vld [vmem:[%s0 + $0x98] sm:$0xff]
      %v249 = vld [vmem:[%s0 + $0xa0] sm:$0xff]
      %v250 = vld [vmem:[%s0 + $0xa8] sm:$0xff]
      %v251 = vld [vmem:[%s0 + $0xb0] sm:$0xff]
      %v252 = vld [vmem:[%s0 + $0xb8] sm:$0xff]
      %v253 = vld [vmem:[%s0 + $0xc0] sm:$0xff]
      %v254 = vld [vmem:[%s0 + $0xc8] sm:$0xff]
      %v255 = vld [vmem:[%s0 + $0xd0] sm:$0xff]
      %v256 = vld [vmem:[%s0 + $0xd8] sm:$0xff]
      %v257 = vld [vmem:[%s0 + $0xe0] sm:$0xff]
      %v258 = vld [vmem:[%s0 + $0xe8] sm:$0xff]
      %v259 = vld [vmem:[%s0 + $0xf0] sm:$0xff]
      %v260 = vld [vmem:[%s0 + $0xf8] sm:$0xff]
      %v261 = vld [vmem:[%s0 + $0x100] sm:$0xff]
      %v262 = vld [vmem:[%s0 + $0x108] sm:$0xff]
      %v263 = vld [vmem:[%s1] sm:$0xff]
      %v264 = vld [vmem:[%s1 + $0x8] sm:$0xff]
      %v265 = vld [vmem:[%s1 + $0x10] sm:$0xff]
      %v266 = vld [vmem:[%s1 + $0x18] sm:$0xff]
      %v267 = vld [vmem:[%s1 + $0x20] sm:$0xff]
      %v268 = vld [vmem:[%s1 + $0x28] sm:$0xff]
      %v269 = vld [vmem:[%s1 + $0x30] sm:$0xff]
      %v270 = vld [vmem:[%s1 + $0x38] sm:$0xff]
      %v271 = vld [vmem:[%s1 + $0x40] sm:$0xff]
      %v272 = vld [vmem:[%s1 + $0x48] sm:$0xff]
      %v273 = vld [vmem:[%s1 + $0x50] sm:$0xff]
      %v274 = vld [vmem:[%s1 + $0x58] sm:$0xff]
      %v275 = vld [vmem:[%s1 + $0x60] sm:$0xff]
      %v276 = vld [vmem:[%s1 + $0x68] sm:$0xff]
      %v277 = vld [vmem:[%s1 + $0x70] sm:$0xff]
      %v278 = vld [vmem:[%s1 + $0x78] sm:$0xff]
      %v279 = vld [vmem:[%s1 + $0x80] sm:$0xff]
      %v280 = vld [vmem:[%s1 + $0x88] sm:$0xff]
      %v281 = vld [vmem:[%s1 + $0x90] sm:$0xff]
      %v282 = vld [vmem:[%s1 + $0x98] sm:$0xff]
      %v283 = vld [vmem:[%s1 + $0xa0] sm:$0xff]
      %v284 = vld [vmem:[%s1 + $0xa8] sm:$0xff]
      %v285 = vld [vmem:[%s1 + $0xb0] sm:$0xff]
      %v286 = vld [vmem:[%s1 + $0xb8] sm:$0xff]
      %v287 = vld [vmem:[%s1 + $0xc0] sm:$0xff]
      %v288 = vld [vmem:[%s1 + $0xc8] sm:$0xff]
      %v289 = vld [vmem:[%s1 + $0xd0] sm:$0xff]
      %v290 = vld [vmem:[%s1 + $0xd8] sm:$0xff]
      %v291 = vld [vmem:[%s1 + $0xe0] sm:$0xff]
      %v292 = vld [vmem:[%s1 + $0xe8] sm:$0xff]
      %v293 = vld [vmem:[%s1 + $0xf0] sm:$0xff]
      %v294 = vld [vmem:[%s1 + $0xf8] sm:$0xff]
      %v295 = vld [vmem:[%s1 + $0x100] sm:$0xff]
      %v296 = vld [vmem:[%s1 + $0x108] sm:$0xff]
      %v297 = vadd.f32 %v229, %v263
      %v298 = vadd.f32 %v230, %v264
      %v299 = vadd.f32 %v231, %v265
      %v300 = vadd.f32 %v232, %v266
      %v301 = vadd.f32 %v233, %v267
      %v302 = vadd.f32 %v234, %v268
      %v303 = vadd.f32 %v235, %v269
      %v304 = vadd.f32 %v236, %v270
      %v305 = vadd.f32 %v237, %v271
      %v306 = vadd.f32 %v238, %v272
      %v307 = vadd.f32 %v239, %v273
      %v308 = vadd.f32 %v240, %v274
      %v309 = vadd.f32 %v241, %v275
      %v310 = vadd.f32 %v242, %v276
      %v311 = vadd.f32 %v243, %v277
      %v312 = vadd.f32 %v244, %v278
      %v313 = vadd.f32 %v245, %v279
      %v314 = vadd.f32 %v246, %v280
      %v315 = vadd.f32 %v247, %v281
      %v316 = vadd.f32 %v248, %v282
      %v317 = vadd.f32 %v249, %v283
      %v318 = vadd.f32 %v250, %v284
      %v319 = vadd.f32 %v251, %v285
      %v320 = vadd.f32 %v252, %v286
      %v321 = vadd.f32 %v253, %v287
      %v322 = vadd.f32 %v254, %v288
      %v323 = vadd.f32 %v255, %v289
      %v324 = vadd.f32 %v256, %v290
      %v325 = vadd.f32 %v257, %v291
      %v326 = vadd.f32 %v258, %v292
      %v327 = vadd.f32 %v259, %v293
      %v328 = vadd.f32 %v260, %v294
      %v329 = vadd.f32 %v261, %v295
      %v330 = vadd.f32 %v262, %v296
      %v331 = vpack.c.bf16 %v299, %v297
      %v332 = vpack.c.bf16 %v300, %v298
      %v333 = vpack.c.bf16 %v303, %v301
      %v334 = vpack.c.bf16 %v304, %v302
      %v335 = vpack.c.bf16 %v307, %v305
      %v336 = vpack.c.bf16 %v308, %v306
      %v337 = vpack.c.bf16 %v311, %v309
      %v338 = vpack.c.bf16 %v312, %v310
      %v339 = vpack.c.bf16 %v315, %v313
      %v340 = vpack.c.bf16 %v316, %v314
      %v341 = vpack.c.bf16 %v319, %v317
      %v342 = vpack.c.bf16 %v320, %v318
      %v343 = vpack.c.bf16 %v323, %v321
      %v344 = vpack.c.bf16 %v324, %v322
      %v345 = vpack.c.bf16 %v327, %v325
      %v346 = vpack.c.bf16 %v328, %v326
      %v347 = vpack.c.bf16 %v329, %v329
      %v348 = vpack.c.bf16 %v330, %v330
      %v349 = vld [vmem:[%s213] sm:$0xff]
      %v350 = vld [vmem:[%s213 + $0x8] sm:$0xff]
      %v351 = vld [vmem:[%s213 + $0x10] sm:$0xff]
      %v352 = vld [vmem:[%s213 + $0x18] sm:$0xff]
      %v353 = vld [vmem:[%s213 + $0x20] sm:$0xff]
      %v354 = vld [vmem:[%s213 + $0x28] sm:$0xff]
      %v355 = vld [vmem:[%s213 + $0x30] sm:$0xff]
      %v356 = vld [vmem:[%s213 + $0x38] sm:$0xff]
      %v357 = vld [vmem:[%s213 + $0x40] sm:$0xff]
      %v358 = vld [vmem:[%s213 + $0x48] sm:$0xff]
      %v359 = vld [vmem:[%s213 + $0x50] sm:$0xff]
      %v360 = vld [vmem:[%s213 + $0x58] sm:$0xff]
      %v361 = vld [vmem:[%s213 + $0x60] sm:$0xff]
      %v362 = vld [vmem:[%s213 + $0x68] sm:$0xff]
      %v363 = vld [vmem:[%s213 + $0x70] sm:$0xff]
      %v364 = vld [vmem:[%s213 + $0x78] sm:$0xff]
      %v365 = vld [vmem:[%s213 + $0x80] sm:$0xff]
      %v366 = vld [vmem:[%s213 + $0x88] sm:$0xff]
      %v367 = vld [vmem:[%s213 + $0x90] sm:$0xff]
      %v368 = vld [vmem:[%s213 + $0x98] sm:$0xff]
      %v369 = vld [vmem:[%s213 + $0xa0] sm:$0xff]
      %v370 = vld [vmem:[%s213 + $0xa8] sm:$0xff]
      %v371 = vld [vmem:[%s213 + $0xb0] sm:$0xff]
      %v372 = vld [vmem:[%s213 + $0xb8] sm:$0xff]
      %v373 = vld [vmem:[%s213 + $0xc0] sm:$0xff]
      %v374 = vld [vmem:[%s213 + $0xc8] sm:$0xff]
      %v375 = vld [vmem:[%s213 + $0xd0] sm:$0xff]
      %v376 = vld [vmem:[%s213 + $0xd8] sm:$0xff]
      %v377 = vld [vmem:[%s213 + $0xe0] sm:$0xff]
      %v378 = vld [vmem:[%s213 + $0xe8] sm:$0xff]
      %v379 = vld [vmem:[%s213 + $0xf0] sm:$0xff]
      %v380 = vld [vmem:[%s213 + $0xf8] sm:$0xff]
      %v381 = vld [vmem:[%s213 + $0x100] sm:$0xff]
      %v382 = vld [vmem:[%s213 + $0x108] sm:$0xff]
      %v383 = vld [vmem:[%s213 + $0x110] sm:$0xff]
      %v384 = vld [vmem:[%s213 + $0x118] sm:$0xff]
      %v385 = vld [vmem:[%s213 + $0x120] sm:$0xff]
      %v386 = vld [vmem:[%s213 + $0x128] sm:$0xff]
      %v387 = vld [vmem:[%s213 + $0x130] sm:$0xff]
      %v388 = vld [vmem:[%s213 + $0x138] sm:$0xff]
      %v389 = vld [vmem:[%s213 + $0x140] sm:$0xff]
      %v390 = vld [vmem:[%s213 + $0x148] sm:$0xff]
      %v391 = vld [vmem:[%s213 + $0x150] sm:$0xff]
      %v392 = vld [vmem:[%s213 + $0x158] sm:$0xff]
      %v393 = vld [vmem:[%s213 + $0x160] sm:$0xff]
      %v394 = vld [vmem:[%s213 + $0x168] sm:$0xff]
      %v395 = vld [vmem:[%s213 + $0x170] sm:$0xff]
      %v396 = vld [vmem:[%s213 + $0x178] sm:$0xff]
      %v397 = vld [vmem:[%s213 + $0x180] sm:$0xff]
      %v398 = vld [vmem:[%s213 + $0x188] sm:$0xff]
      %v399 = vld [vmem:[%s213 + $0x190] sm:$0xff]
      %v451 = vunpack.c.l.b16 %v349
      %v452 = vunpack.c.h.b16 %v349
      %v453 = vunpack.c.l.b16 %v350
      %v454 = vunpack.c.h.b16 %v350
      %v455 = vunpack.c.l.b16 %v351
      %v456 = vunpack.c.h.b16 %v351
      %v457 = vunpack.c.l.b16 %v352
      %v458 = vunpack.c.h.b16 %v352
      %v459 = vunpack.c.l.b16 %v353
      %v460 = vunpack.c.h.b16 %v353
      %v461 = vunpack.c.l.b16 %v354
      %v462 = vunpack.c.h.b16 %v354
      %v463 = vunpack.c.l.b16 %v355
      %v464 = vunpack.c.h.b16 %v355
      %v465 = vunpack.c.l.b16 %v356
      %v466 = vunpack.c.h.b16 %v356
      %v467 = vunpack.c.l.b16 %v357
      %v468 = vunpack.c.h.b16 %v357
      %v469 = vunpack.c.l.b16 %v358
      %v470 = vunpack.c.h.b16 %v358
      %v471 = vunpack.c.l.b16 %v359
      %v472 = vunpack.c.h.b16 %v359
      %v473 = vunpack.c.l.b16 %v360
      %v474 = vunpack.c.h.b16 %v360
      %v475 = vunpack.c.l.b16 %v361
      %v476 = vunpack.c.h.b16 %v361
      %v477 = vunpack.c.l.b16 %v362
      %v478 = vunpack.c.h.b16 %v362
      %v479 = vunpack.c.l.b16 %v363
      %v480 = vunpack.c.h.b16 %v363
      %v481 = vunpack.c.l.b16 %v364
      %v482 = vunpack.c.h.b16 %v364
      %v483 = vunpack.c.l.b16 %v365
      %v484 = vunpack.c.h.b16 %v365
      %v485 = vunpack.c.l.b16 %v366
      %v486 = vunpack.c.h.b16 %v366
      %v487 = vunpack.c.l.b16 %v367
      %v488 = vunpack.c.h.b16 %v367
      %v489 = vunpack.c.l.b16 %v368
      %v490 = vunpack.c.h.b16 %v368
      %v491 = vunpack.c.l.b16 %v369
      %v492 = vunpack.c.h.b16 %v369
      %v493 = vunpack.c.l.b16 %v370
      %v494 = vunpack.c.h.b16 %v370
      %v495 = vunpack.c.l.b16 %v371
      %v496 = vunpack.c.h.b16 %v371
      %v497 = vunpack.c.l.b16 %v372
      %v498 = vunpack.c.h.b16 %v372
      %v499 = vunpack.c.l.b16 %v373
      %v500 = vunpack.c.h.b16 %v373
      %v501 = vunpack.c.l.b16 %v374
      %v502 = vunpack.c.h.b16 %v374
      %v503 = vunpack.c.l.b16 %v375
      %v504 = vunpack.c.h.b16 %v375
      %v505 = vunpack.c.l.b16 %v376
      %v506 = vunpack.c.h.b16 %v376
      %v507 = vunpack.c.l.b16 %v377
      %v508 = vunpack.c.h.b16 %v377
      %v509 = vunpack.c.l.b16 %v378
      %v510 = vunpack.c.h.b16 %v378
      %v511 = vunpack.c.l.b16 %v379
      %v512 = vunpack.c.h.b16 %v379
      %v513 = vunpack.c.l.b16 %v380
      %v514 = vunpack.c.h.b16 %v380
      %v515 = vunpack.c.l.b16 %v381
      %v516 = vunpack.c.h.b16 %v381
      %v517 = vunpack.c.l.b16 %v382
      %v518 = vunpack.c.h.b16 %v382
      %v519 = vunpack.c.l.b16 %v383
      %v520 = vunpack.c.h.b16 %v383
      %v521 = vunpack.c.l.b16 %v384
      %v522 = vunpack.c.h.b16 %v384
      %v523 = vunpack.c.l.b16 %v385
      %v524 = vunpack.c.h.b16 %v385
      %v525 = vunpack.c.l.b16 %v386
      %v526 = vunpack.c.h.b16 %v386
      %v527 = vunpack.c.l.b16 %v387
      %v528 = vunpack.c.h.b16 %v387
      %v529 = vunpack.c.l.b16 %v388
      %v530 = vunpack.c.h.b16 %v388
      %v531 = vunpack.c.l.b16 %v389
      %v532 = vunpack.c.h.b16 %v389
      %v533 = vunpack.c.l.b16 %v390
      %v534 = vunpack.c.h.b16 %v390
      %v535 = vunpack.c.l.b16 %v391
      %v536 = vunpack.c.h.b16 %v391
      %v537 = vunpack.c.l.b16 %v392
      %v538 = vunpack.c.h.b16 %v392
      %v539 = vunpack.c.l.b16 %v393
      %v540 = vunpack.c.h.b16 %v393
      %v541 = vunpack.c.l.b16 %v394
      %v542 = vunpack.c.h.b16 %v394
      %v543 = vunpack.c.l.b16 %v395
      %v544 = vunpack.c.h.b16 %v395
      %v545 = vunpack.c.l.b16 %v396
      %v546 = vunpack.c.h.b16 %v396
      %v547 = vunpack.c.l.b16 %v397
      %v548 = vunpack.c.h.b16 %v397
      %v549 = vunpack.c.l.b16 %v398
      %v550 = vunpack.c.h.b16 %v398
      %v551 = vunpack.c.l.b16 %v399
      %v552 = vunpack.c.h.b16 %v399
      %v553 = vpack.c.b16 %v453, %v451
      %v554 = vpack.c.b16 %v454, %v452
      %v555 = vpack.c.b16 %v457, %v455
      %v556 = vpack.c.b16 %v458, %v456
      %v557 = vpack.c.b16 %v461, %v459
      %v558 = vpack.c.b16 %v462, %v460
      %v559 = vpack.c.b16 %v465, %v463
      %v560 = vpack.c.b16 %v466, %v464
      %v561 = vpack.c.b16 %v469, %v467
      %v562 = vpack.c.b16 %v470, %v468
      %v563 = vpack.c.b16 %v473, %v471
      %v564 = vpack.c.b16 %v474, %v472
      %v565 = vpack.c.b16 %v477, %v475
      %v566 = vpack.c.b16 %v478, %v476
      %v567 = vpack.c.b16 %v481, %v479
      %v568 = vpack.c.b16 %v482, %v480
      %v569 = vpack.c.b16 %v485, %v483
      %v570 = vpack.c.b16 %v486, %v484
      %v571 = vpack.c.b16 %v489, %v487
      %v572 = vpack.c.b16 %v490, %v488
      %v573 = vpack.c.b16 %v493, %v491
      %v574 = vpack.c.b16 %v494, %v492
      %v575 = vpack.c.b16 %v497, %v495
      %v576 = vpack.c.b16 %v498, %v496
      %v577 = vpack.c.b16 %v501, %v499
      %v578 = vpack.c.b16 %v502, %v500
      %v579 = vpack.c.b16 %v505, %v503
      %v580 = vpack.c.b16 %v506, %v504
      %v581 = vpack.c.b16 %v509, %v507
      %v582 = vpack.c.b16 %v510, %v508
      %v583 = vpack.c.b16 %v513, %v511
      %v584 = vpack.c.b16 %v514, %v512
      %v585 = vpack.c.b16 %v517, %v515
      %v586 = vpack.c.b16 %v518, %v516
      %v587 = vpack.c.b16 %v521, %v519
      %v588 = vpack.c.b16 %v522, %v520
      %v589 = vpack.c.b16 %v525, %v523
      %v590 = vpack.c.b16 %v526, %v524
      %v591 = vpack.c.b16 %v529, %v527
      %v592 = vpack.c.b16 %v530, %v528
      %v593 = vpack.c.b16 %v533, %v531
      %v594 = vpack.c.b16 %v534, %v532
      %v595 = vpack.c.b16 %v537, %v535
      %v596 = vpack.c.b16 %v538, %v536
      %v597 = vpack.c.b16 %v541, %v539
      %v598 = vpack.c.b16 %v542, %v540
      %v599 = vpack.c.b16 %v545, %v543
      %v600 = vpack.c.b16 %v546, %v544
      %v601 = vpack.c.b16 %v549, %v547
      %v602 = vpack.c.b16 %v550, %v548
      %v603 = vpack.c.b16 %v551, %v551
      %v604 = vpack.c.b16 %v552, %v552
      %vm631 = vcmask 64512
      %v633 = vsel %vm631, %v554, 0
      %v636 = vsel %vm631, %v556, 0
      %v639 = vsel %vm631, %v558, 0
      %v642 = vsel %vm631, %v560, 0
      %v645 = vsel %vm631, %v562, 0
      %v648 = vsel %vm631, %v564, 0
      %v651 = vsel %vm631, %v566, 0
      %v654 = vsel %vm631, %v568, 0
      %v657 = vsel %vm631, %v570, 0
      %v660 = vsel %vm631, %v572, 0
      %v663 = vsel %vm631, %v574, 0
      %v666 = vsel %vm631, %v576, 0
      %v669 = vsel %vm631, %v578, 0
      %v672 = vsel %vm631, %v580, 0
      %v675 = vsel %vm631, %v582, 0
      %v678 = vsel %vm631, %v584, 0
      %v681 = vsel %vm631, %v586, 0
      %v684 = vsel %vm631, %v588, 0
      %v687 = vsel %vm631, %v590, 0
      %v690 = vsel %vm631, %v592, 0
      %v693 = vsel %vm631, %v594, 0
      %v696 = vsel %vm631, %v596, 0
      %v699 = vsel %vm631, %v598, 0
      %v702 = vsel %vm631, %v600, 0
      %v705 = vsel %vm631, %v602, 0
      %v708 = vsel %vm631, %v604, 0
      %vm710 = vcmask 1043456
      %v712 = vsel %vm710, %v347, 0
      %v715 = vsel %vm710, %v348, 0
      %717 = vmatprep.subr.bf16.mxu0 %v346
      %718 = vmatpush1.bf16.msra.mxu0 %v345
      %719 = vmatprep.subr.bf16.mxu0 %v344
      %720 = vmatpush1.bf16.msra.mxu0 %v343
      %721 = vmatprep.subr.bf16.mxu0 %v342
      %722 = vmatpush1.bf16.msra.mxu0 %v341
      %723 = vmatprep.subr.bf16.mxu0 %v340
      %724 = vmatpush1.bf16.msra.mxu0 %v339
      %725 = vmatprep.subr.bf16.mxu0 %v338
      %726 = vmatpush1.bf16.msra.mxu0 %v337
      %727 = vmatprep.subr.bf16.mxu0 %v336
      %728 = vmatpush1.bf16.msra.mxu0 %v335
      %729 = vmatprep.subr.bf16.mxu0 %v334
      %730 = vmatpush1.bf16.msra.mxu0 %v333
      %731 = vmatprep.subr.bf16.mxu0 %v332
      %732 = vmatpush1.bf16.msra.mxu0 %v331
      %733 = vmatprep.subr.bf16.mxu0 0
      %734 = vmatpush2.bf16.msra.mxu0 0
      %735 = vmatprep.subr.bf16.mxu0 0
      %736 = vmatpush2.bf16.msra.mxu0 0
      %737 = vmatprep.subr.bf16.mxu0 0
      %738 = vmatpush2.bf16.msra.mxu0 0
      %739 = vmatprep.subr.bf16.mxu0 0
      %740 = vmatpush2.bf16.msra.mxu0 0
      %741 = vmatprep.subr.bf16.mxu0 0
      %742 = vmatpush2.bf16.msra.mxu0 0
      %743 = vmatprep.subr.bf16.mxu0 0
      %744 = vmatpush2.bf16.msra.mxu0 0
      %745 = vmatprep.subr.bf16.mxu0 0
      %746 = vmatpush2.bf16.msra.mxu0 0
      %747 = vmatprep.subr.bf16.mxu0 %v715
      %748 = vmatpush2.bf16.msra.mxu0 %v712
      %749 = vmatprep.mubr.bf16.mxu0 %v633
      %750 = vmatmul.mubr.bf16.gmra.mxu0 %v553
      %v751 = vpop.f32.mrf.mxu0
      %v752 = vadd.f32 0.0, %v751
      %v753 = vpop.f32.mrf.mxu0
      %v754 = vadd.f32 0.0, %v753
      %v755 = vpop.f32.mrf.mxu0
      %v756 = vadd.f32 0.0, %v755
      %v757 = vpop.f32.mrf.mxu0
      %v758 = vadd.f32 0.0, %v757
      %759 = vmatprep.mubr.bf16.mxu0 %v636
      %760 = vmatmul.mubr.bf16.gmra.mxu0 %v555
      %v761 = vpop.f32.mrf.mxu0
      %v762 = vadd.f32 0.0, %v761
      %v763 = vpop.f32.mrf.mxu0
      %v764 = vadd.f32 0.0, %v763
      %v765 = vpop.f32.mrf.mxu0
      %v766 = vadd.f32 0.0, %v765
      %v767 = vpop.f32.mrf.mxu0
      %v768 = vadd.f32 0.0, %v767
      %769 = vmatprep.mubr.bf16.mxu0 %v639
      %770 = vmatmul.mubr.bf16.gmra.mxu0 %v557
      %v771 = vpop.f32.mrf.mxu0
      %v772 = vadd.f32 0.0, %v771
      %v773 = vpop.f32.mrf.mxu0
      %v774 = vadd.f32 0.0, %v773
      %v775 = vpop.f32.mrf.mxu0
      %v776 = vadd.f32 0.0, %v775
      %v777 = vpop.f32.mrf.mxu0
      %v778 = vadd.f32 0.0, %v777
      %779 = vmatprep.mubr.bf16.mxu0 %v642
      %780 = vmatmul.mubr.bf16.gmra.mxu0 %v559
      %v781 = vpop.f32.mrf.mxu0
      %v782 = vadd.f32 0.0, %v781
      %v783 = vpop.f32.mrf.mxu0
      %v784 = vadd.f32 0.0, %v783
      %v785 = vpop.f32.mrf.mxu0
      %v786 = vadd.f32 0.0, %v785
      %v787 = vpop.f32.mrf.mxu0
      %v788 = vadd.f32 0.0, %v787
      %789 = vmatprep.mubr.bf16.mxu0 %v645
      %790 = vmatmul.mubr.bf16.gmra.mxu0 %v561
      %v791 = vpop.f32.mrf.mxu0
      %v792 = vadd.f32 0.0, %v791
      %v793 = vpop.f32.mrf.mxu0
      %v794 = vadd.f32 0.0, %v793
      %v795 = vpop.f32.mrf.mxu0
      %v796 = vadd.f32 0.0, %v795
      %v797 = vpop.f32.mrf.mxu0
      %v798 = vadd.f32 0.0, %v797
      %799 = vmatprep.mubr.bf16.mxu0 %v648
      %800 = vmatmul.mubr.bf16.gmra.mxu0 %v563
      %v801 = vpop.f32.mrf.mxu0
      %v802 = vadd.f32 0.0, %v801
      %v803 = vpop.f32.mrf.mxu0
      %v804 = vadd.f32 0.0, %v803
      %v805 = vpop.f32.mrf.mxu0
      %v806 = vadd.f32 0.0, %v805
      %v807 = vpop.f32.mrf.mxu0
      %v808 = vadd.f32 0.0, %v807
      %809 = vmatprep.mubr.bf16.mxu0 %v651
      %810 = vmatmul.mubr.bf16.gmra.mxu0 %v565
      %v811 = vpop.f32.mrf.mxu0
      %v812 = vadd.f32 0.0, %v811
      %v813 = vpop.f32.mrf.mxu0
      %v814 = vadd.f32 0.0, %v813
      %v815 = vpop.f32.mrf.mxu0
      %v816 = vadd.f32 0.0, %v815
      %v817 = vpop.f32.mrf.mxu0
      %v818 = vadd.f32 0.0, %v817
      %819 = vmatprep.mubr.bf16.mxu0 %v654
      %820 = vmatmul.mubr.bf16.gmra.mxu0 %v567
      %v821 = vpop.f32.mrf.mxu0
      %v822 = vadd.f32 0.0, %v821
      %v823 = vpop.f32.mrf.mxu0
      %v824 = vadd.f32 0.0, %v823
      %v825 = vpop.f32.mrf.mxu0
      %v826 = vadd.f32 0.0, %v825
      %v827 = vpop.f32.mrf.mxu0
      %v828 = vadd.f32 0.0, %v827
      %829 = vmatprep.mubr.bf16.mxu0 %v657
      %830 = vmatmul.mubr.bf16.gmra.mxu0 %v569
      %v831 = vpop.f32.mrf.mxu0
      %v832 = vadd.f32 0.0, %v831
      %v833 = vpop.f32.mrf.mxu0
      %v834 = vadd.f32 0.0, %v833
      %v835 = vpop.f32.mrf.mxu0
      %v836 = vadd.f32 0.0, %v835
      %v837 = vpop.f32.mrf.mxu0
      %v838 = vadd.f32 0.0, %v837
      %839 = vmatprep.mubr.bf16.mxu0 %v660
      %840 = vmatmul.mubr.bf16.gmra.mxu0 %v571
      %v841 = vpop.f32.mrf.mxu0
      %v842 = vadd.f32 0.0, %v841
      %v843 = vpop.f32.mrf.mxu0
      %v844 = vadd.f32 0.0, %v843
      %v845 = vpop.f32.mrf.mxu0
      %v846 = vadd.f32 0.0, %v845
      %v847 = vpop.f32.mrf.mxu0
      %v848 = vadd.f32 0.0, %v847
      %849 = vmatprep.mubr.bf16.mxu0 %v663
      %850 = vmatmul.mubr.bf16.gmra.mxu0 %v573
      %v851 = vpop.f32.mrf.mxu0
      %v852 = vadd.f32 0.0, %v851
      %v853 = vpop.f32.mrf.mxu0
      %v854 = vadd.f32 0.0, %v853
      %v855 = vpop.f32.mrf.mxu0
      %v856 = vadd.f32 0.0, %v855
      %v857 = vpop.f32.mrf.mxu0
      %v858 = vadd.f32 0.0, %v857
      %859 = vmatprep.mubr.bf16.mxu0 %v666
      %860 = vmatmul.mubr.bf16.gmra.mxu0 %v575
      %v861 = vpop.f32.mrf.mxu0
      %v862 = vadd.f32 0.0, %v861
      %v863 = vpop.f32.mrf.mxu0
      %v864 = vadd.f32 0.0, %v863
      %v865 = vpop.f32.mrf.mxu0
      %v866 = vadd.f32 0.0, %v865
      %v867 = vpop.f32.mrf.mxu0
      %v868 = vadd.f32 0.0, %v867
      %869 = vmatprep.mubr.bf16.mxu0 %v669
      %870 = vmatmul.mubr.bf16.gmra.mxu0 %v577
      %v871 = vpop.f32.mrf.mxu0
      %v872 = vadd.f32 0.0, %v871
      %v873 = vpop.f32.mrf.mxu0
      %v874 = vadd.f32 0.0, %v873
      %v875 = vpop.f32.mrf.mxu0
      %v876 = vadd.f32 0.0, %v875
      %v877 = vpop.f32.mrf.mxu0
      %v878 = vadd.f32 0.0, %v877
      %879 = vmatprep.mubr.bf16.mxu0 %v672
      %880 = vmatmul.mubr.bf16.gmra.mxu0 %v579
      %v881 = vpop.f32.mrf.mxu0
      %v882 = vadd.f32 0.0, %v881
      %v883 = vpop.f32.mrf.mxu0
      %v884 = vadd.f32 0.0, %v883
      %v885 = vpop.f32.mrf.mxu0
      %v886 = vadd.f32 0.0, %v885
      %v887 = vpop.f32.mrf.mxu0
      %v888 = vadd.f32 0.0, %v887
      %889 = vmatprep.mubr.bf16.mxu0 %v675
      %890 = vmatmul.mubr.bf16.gmra.mxu0 %v581
      %v891 = vpop.f32.mrf.mxu0
      %v892 = vadd.f32 0.0, %v891
      %v893 = vpop.f32.mrf.mxu0
      %v894 = vadd.f32 0.0, %v893
      %v895 = vpop.f32.mrf.mxu0
      %v896 = vadd.f32 0.0, %v895
      %v897 = vpop.f32.mrf.mxu0
      %v898 = vadd.f32 0.0, %v897
      %899 = vmatprep.mubr.bf16.mxu0 %v678
      %900 = vmatmul.mubr.bf16.gmra.mxu0 %v583
      %v901 = vpop.f32.mrf.mxu0
      %v902 = vadd.f32 0.0, %v901
      %v903 = vpop.f32.mrf.mxu0
      %v904 = vadd.f32 0.0, %v903
      %v905 = vpop.f32.mrf.mxu0
      %v906 = vadd.f32 0.0, %v905
      %v907 = vpop.f32.mrf.mxu0
      %v908 = vadd.f32 0.0, %v907
      %909 = vmatprep.mubr.bf16.mxu0 %v681
      %910 = vmatmul.mubr.bf16.gmra.mxu0 %v585
      %v911 = vpop.f32.mrf.mxu0
      %v912 = vadd.f32 0.0, %v911
      %v913 = vpop.f32.mrf.mxu0
      %v914 = vadd.f32 0.0, %v913
      %v915 = vpop.f32.mrf.mxu0
      %v916 = vadd.f32 0.0, %v915
      %v917 = vpop.f32.mrf.mxu0
      %v918 = vadd.f32 0.0, %v917
      %919 = vmatprep.mubr.bf16.mxu0 %v684
      %920 = vmatmul.mubr.bf16.gmra.mxu0 %v587
      %v921 = vpop.f32.mrf.mxu0
      %v922 = vadd.f32 0.0, %v921
      %v923 = vpop.f32.mrf.mxu0
      %v924 = vadd.f32 0.0, %v923
      %v925 = vpop.f32.mrf.mxu0
      %v926 = vadd.f32 0.0, %v925
      %v927 = vpop.f32.mrf.mxu0
      %v928 = vadd.f32 0.0, %v927
      %929 = vmatprep.mubr.bf16.mxu0 %v687
      %930 = vmatmul.mubr.bf16.gmra.mxu0 %v589
      %v931 = vpop.f32.mrf.mxu0
      %v932 = vadd.f32 0.0, %v931
      %v933 = vpop.f32.mrf.mxu0
      %v934 = vadd.f32 0.0, %v933
      %v935 = vpop.f32.mrf.mxu0
      %v936 = vadd.f32 0.0, %v935
      %v937 = vpop.f32.mrf.mxu0
      %v938 = vadd.f32 0.0, %v937
      %939 = vmatprep.mubr.bf16.mxu0 %v690
      %940 = vmatmul.mubr.bf16.gmra.mxu0 %v591
      %v941 = vpop.f32.mrf.mxu0
      %v942 = vadd.f32 0.0, %v941
      %v943 = vpop.f32.mrf.mxu0
      %v944 = vadd.f32 0.0, %v943
      %v945 = vpop.f32.mrf.mxu0
      %v946 = vadd.f32 0.0, %v945
      %v947 = vpop.f32.mrf.mxu0
      %v948 = vadd.f32 0.0, %v947
      %949 = vmatprep.mubr.bf16.mxu0 %v693
      %950 = vmatmul.mubr.bf16.gmra.mxu0 %v593
      %v951 = vpop.f32.mrf.mxu0
      %v952 = vadd.f32 0.0, %v951
      %v953 = vpop.f32.mrf.mxu0
      %v954 = vadd.f32 0.0, %v953
      %v955 = vpop.f32.mrf.mxu0
      %v956 = vadd.f32 0.0, %v955
      %v957 = vpop.f32.mrf.mxu0
      %v958 = vadd.f32 0.0, %v957
      %959 = vmatprep.mubr.bf16.mxu0 %v696
      %960 = vmatmul.mubr.bf16.gmra.mxu0 %v595
      %v961 = vpop.f32.mrf.mxu0
      %v962 = vadd.f32 0.0, %v961
      %v963 = vpop.f32.mrf.mxu0
      %v964 = vadd.f32 0.0, %v963
      %v965 = vpop.f32.mrf.mxu0
      %v966 = vadd.f32 0.0, %v965
      %v967 = vpop.f32.mrf.mxu0
      %v968 = vadd.f32 0.0, %v967
      %969 = vmatprep.mubr.bf16.mxu0 %v699
      %970 = vmatmul.mubr.bf16.gmra.mxu0 %v597
      %v971 = vpop.f32.mrf.mxu0
      %v972 = vadd.f32 0.0, %v971
      %v973 = vpop.f32.mrf.mxu0
      %v974 = vadd.f32 0.0, %v973
      %v975 = vpop.f32.mrf.mxu0
      %v976 = vadd.f32 0.0, %v975
      %v977 = vpop.f32.mrf.mxu0
      %v978 = vadd.f32 0.0, %v977
      %979 = vmatprep.mubr.bf16.mxu0 %v702
      %980 = vmatmul.mubr.bf16.gmra.mxu0 %v599
      %v981 = vpop.f32.mrf.mxu0
      %v982 = vadd.f32 0.0, %v981
      %v983 = vpop.f32.mrf.mxu0
      %v984 = vadd.f32 0.0, %v983
      %v985 = vpop.f32.mrf.mxu0
      %v986 = vadd.f32 0.0, %v985
      %v987 = vpop.f32.mrf.mxu0
      %v988 = vadd.f32 0.0, %v987
      %989 = vmatprep.mubr.bf16.mxu0 %v705
      %990 = vmatmul.mubr.bf16.gmra.mxu0 %v601
      %v991 = vpop.f32.mrf.mxu0
      %v992 = vadd.f32 0.0, %v991
      %v993 = vpop.f32.mrf.mxu0
      %v994 = vadd.f32 0.0, %v993
      %v995 = vpop.f32.mrf.mxu0
      %v996 = vadd.f32 0.0, %v995
      %v997 = vpop.f32.mrf.mxu0
      %v998 = vadd.f32 0.0, %v997
      %999 = vmatprep.mubr.bf16.mxu0 %v708
      %1000 = vmatmul.mubr.bf16.gmra.mxu0 %v603
      %v1001 = vpop.f32.mrf.mxu0
      %v1002 = vadd.f32 0.0, %v1001
      %v1003 = vpop.f32.mrf.mxu0
      %v1004 = vadd.f32 0.0, %v1003
      %v1005 = vpop.f32.mrf.mxu0
      %v1006 = vpop.f32.mrf.mxu0
      %1007 = vdwg.mxu0
      %vm1008 = vcmask 556032
      %v1009 = vsel %vm1008, %v754, 0.0
      %v1010 = vadd.f32 %v752, %v1009
      %1011 = vadd.xlane.f32.xlu0 %v1010
      %v1012 = vpop.xlane.xlu0 %1011
      %v1013 = vsel %vm1008, %v758, 0.0
      %v1014 = vadd.f32 %v756, %v1013
      %1015 = vadd.xlane.f32.xlu0 %v1014
      %v1016 = vpop.xlane.xlu0 %1015
      %v1017 = vsel %vm1008, %v764, 0.0
      %v1018 = vadd.f32 %v762, %v1017
      %1019 = vadd.xlane.f32.xlu0 %v1018
      %v1020 = vpop.xlane.xlu0 %1019
      %v1021 = vsel %vm1008, %v768, 0.0
      %v1022 = vadd.f32 %v766, %v1021
      %1023 = vadd.xlane.f32.xlu0 %v1022
      %v1024 = vpop.xlane.xlu0 %1023
      %v1025 = vsel %vm1008, %v774, 0.0
      %v1026 = vadd.f32 %v772, %v1025
      %1027 = vadd.xlane.f32.xlu0 %v1026
      %v1028 = vpop.xlane.xlu0 %1027
      %v1029 = vsel %vm1008, %v778, 0.0
      %v1030 = vadd.f32 %v776, %v1029
      %1031 = vadd.xlane.f32.xlu0 %v1030
      %v1032 = vpop.xlane.xlu0 %1031
      %v1033 = vsel %vm1008, %v784, 0.0
      %v1034 = vadd.f32 %v782, %v1033
      %1035 = vadd.xlane.f32.xlu0 %v1034
      %v1036 = vpop.xlane.xlu0 %1035
      %v1037 = vsel %vm1008, %v788, 0.0
      %v1038 = vadd.f32 %v786, %v1037
      %1039 = vadd.xlane.f32.xlu0 %v1038
      %v1040 = vpop.xlane.xlu0 %1039
      %v1041 = vsel %vm1008, %v794, 0.0
      %v1042 = vadd.f32 %v792, %v1041
      %1043 = vadd.xlane.f32.xlu0 %v1042
      %v1044 = vpop.xlane.xlu0 %1043
      %v1045 = vsel %vm1008, %v798, 0.0
      %v1046 = vadd.f32 %v796, %v1045
      %1047 = vadd.xlane.f32.xlu0 %v1046
      %v1048 = vpop.xlane.xlu0 %1047
      %v1049 = vsel %vm1008, %v804, 0.0
      %v1050 = vadd.f32 %v802, %v1049
      %1051 = vadd.xlane.f32.xlu0 %v1050
      %v1052 = vpop.xlane.xlu0 %1051
      %v1053 = vsel %vm1008, %v808, 0.0
      %v1054 = vadd.f32 %v806, %v1053
      %1055 = vadd.xlane.f32.xlu0 %v1054
      %v1056 = vpop.xlane.xlu0 %1055
      %v1057 = vsel %vm1008, %v814, 0.0
      %v1058 = vadd.f32 %v812, %v1057
      %1059 = vadd.xlane.f32.xlu0 %v1058
      %v1060 = vpop.xlane.xlu0 %1059
      %v1061 = vsel %vm1008, %v818, 0.0
      %v1062 = vadd.f32 %v816, %v1061
      %1063 = vadd.xlane.f32.xlu0 %v1062
      %v1064 = vpop.xlane.xlu0 %1063
      %v1065 = vsel %vm1008, %v824, 0.0
      %v1066 = vadd.f32 %v822, %v1065
      %1067 = vadd.xlane.f32.xlu0 %v1066
      %v1068 = vpop.xlane.xlu0 %1067
      %v1069 = vsel %vm1008, %v828, 0.0
      %v1070 = vadd.f32 %v826, %v1069
      %1071 = vadd.xlane.f32.xlu0 %v1070
      %v1072 = vpop.xlane.xlu0 %1071
      %v1073 = vsel %vm1008, %v834, 0.0
      %v1074 = vadd.f32 %v832, %v1073
      %1075 = vadd.xlane.f32.xlu0 %v1074
      %v1076 = vpop.xlane.xlu0 %1075
      %v1077 = vsel %vm1008, %v838, 0.0
      %v1078 = vadd.f32 %v836, %v1077
      %1079 = vadd.xlane.f32.xlu0 %v1078
      %v1080 = vpop.xlane.xlu0 %1079
      %v1081 = vsel %vm1008, %v844, 0.0
      %v1082 = vadd.f32 %v842, %v1081
      %1083 = vadd.xlane.f32.xlu0 %v1082
      %v1084 = vpop.xlane.xlu0 %1083
      %v1085 = vsel %vm1008, %v848, 0.0
      %v1086 = vadd.f32 %v846, %v1085
      %1087 = vadd.xlane.f32.xlu0 %v1086
      %v1088 = vpop.xlane.xlu0 %1087
      %v1089 = vsel %vm1008, %v854, 0.0
      %v1090 = vadd.f32 %v852, %v1089
      %1091 = vadd.xlane.f32.xlu0 %v1090
      %v1092 = vpop.xlane.xlu0 %1091
      %v1093 = vsel %vm1008, %v858, 0.0
      %v1094 = vadd.f32 %v856, %v1093
      %1095 = vadd.xlane.f32.xlu0 %v1094
      %v1096 = vpop.xlane.xlu0 %1095
      %v1097 = vsel %vm1008, %v864, 0.0
      %v1098 = vadd.f32 %v862, %v1097
      %1099 = vadd.xlane.f32.xlu0 %v1098
      %v1100 = vpop.xlane.xlu0 %1099
      %v1101 = vsel %vm1008, %v868, 0.0
      %v1102 = vadd.f32 %v866, %v1101
      %1103 = vadd.xlane.f32.xlu0 %v1102
      %v1104 = vpop.xlane.xlu0 %1103
      %v1105 = vsel %vm1008, %v874, 0.0
      %v1106 = vadd.f32 %v872, %v1105
      %1107 = vadd.xlane.f32.xlu0 %v1106
      %v1108 = vpop.xlane.xlu0 %1107
      %v1109 = vsel %vm1008, %v878, 0.0
      %v1110 = vadd.f32 %v876, %v1109
      %1111 = vadd.xlane.f32.xlu0 %v1110
      %v1112 = vpop.xlane.xlu0 %1111
      %v1113 = vsel %vm1008, %v884, 0.0
      %v1114 = vadd.f32 %v882, %v1113
      %1115 = vadd.xlane.f32.xlu0 %v1114
      %v1116 = vpop.xlane.xlu0 %1115
      %v1117 = vsel %vm1008, %v888, 0.0
      %v1118 = vadd.f32 %v886, %v1117
      %1119 = vadd.xlane.f32.xlu0 %v1118
      %v1120 = vpop.xlane.xlu0 %1119
      %v1121 = vsel %vm1008, %v894, 0.0
      %v1122 = vadd.f32 %v892, %v1121
      %1123 = vadd.xlane.f32.xlu0 %v1122
      %v1124 = vpop.xlane.xlu0 %1123
      %v1125 = vsel %vm1008, %v898, 0.0
      %v1126 = vadd.f32 %v896, %v1125
      %1127 = vadd.xlane.f32.xlu0 %v1126
      %v1128 = vpop.xlane.xlu0 %1127
      %v1129 = vsel %vm1008, %v904, 0.0
      %v1130 = vadd.f32 %v902, %v1129
      %1131 = vadd.xlane.f32.xlu0 %v1130
      %v1132 = vpop.xlane.xlu0 %1131
      %v1133 = vsel %vm1008, %v908, 0.0
      %v1134 = vadd.f32 %v906, %v1133
      %1135 = vadd.xlane.f32.xlu0 %v1134
      %v1136 = vpop.xlane.xlu0 %1135
      %v1137 = vsel %vm1008, %v914, 0.0
      %v1138 = vadd.f32 %v912, %v1137
      %1139 = vadd.xlane.f32.xlu0 %v1138
      %v1140 = vpop.xlane.xlu0 %1139
      %v1141 = vsel %vm1008, %v918, 0.0
      %v1142 = vadd.f32 %v916, %v1141
      %1143 = vadd.xlane.f32.xlu0 %v1142
      %v1144 = vpop.xlane.xlu0 %1143
      %v1145 = vsel %vm1008, %v924, 0.0
      %v1146 = vadd.f32 %v922, %v1145
      %1147 = vadd.xlane.f32.xlu0 %v1146
      %v1148 = vpop.xlane.xlu0 %1147
      %v1149 = vsel %vm1008, %v928, 0.0
      %v1150 = vadd.f32 %v926, %v1149
      %1151 = vadd.xlane.f32.xlu0 %v1150
      %v1152 = vpop.xlane.xlu0 %1151
      %v1153 = vsel %vm1008, %v934, 0.0
      %v1154 = vadd.f32 %v932, %v1153
      %1155 = vadd.xlane.f32.xlu0 %v1154
      %v1156 = vpop.xlane.xlu0 %1155
      %v1157 = vsel %vm1008, %v938, 0.0
      %v1158 = vadd.f32 %v936, %v1157
      %1159 = vadd.xlane.f32.xlu0 %v1158
      %v1160 = vpop.xlane.xlu0 %1159
      %v1161 = vsel %vm1008, %v944, 0.0
      %v1162 = vadd.f32 %v942, %v1161
      %1163 = vadd.xlane.f32.xlu0 %v1162
      %v1164 = vpop.xlane.xlu0 %1163
      %v1165 = vsel %vm1008, %v948, 0.0
      %v1166 = vadd.f32 %v946, %v1165
      %1167 = vadd.xlane.f32.xlu0 %v1166
      %v1168 = vpop.xlane.xlu0 %1167
      %v1169 = vsel %vm1008, %v954, 0.0
      %v1170 = vadd.f32 %v952, %v1169
      %1171 = vadd.xlane.f32.xlu0 %v1170
      %v1172 = vpop.xlane.xlu0 %1171
      %v1173 = vsel %vm1008, %v958, 0.0
      %v1174 = vadd.f32 %v956, %v1173
      %1175 = vadd.xlane.f32.xlu0 %v1174
      %v1176 = vpop.xlane.xlu0 %1175
      %v1177 = vsel %vm1008, %v964, 0.0
      %v1178 = vadd.f32 %v962, %v1177
      %1179 = vadd.xlane.f32.xlu0 %v1178
      %v1180 = vpop.xlane.xlu0 %1179
      %v1181 = vsel %vm1008, %v968, 0.0
      %v1182 = vadd.f32 %v966, %v1181
      %1183 = vadd.xlane.f32.xlu0 %v1182
      %v1184 = vpop.xlane.xlu0 %1183
      %v1185 = vsel %vm1008, %v974, 0.0
      %v1186 = vadd.f32 %v972, %v1185
      %1187 = vadd.xlane.f32.xlu0 %v1186
      %v1188 = vpop.xlane.xlu0 %1187
      %v1189 = vsel %vm1008, %v978, 0.0
      %v1190 = vadd.f32 %v976, %v1189
      %1191 = vadd.xlane.f32.xlu0 %v1190
      %v1192 = vpop.xlane.xlu0 %1191
      %v1193 = vsel %vm1008, %v984, 0.0
      %v1194 = vadd.f32 %v982, %v1193
      %1195 = vadd.xlane.f32.xlu0 %v1194
      %v1196 = vpop.xlane.xlu0 %1195
      %v1197 = vsel %vm1008, %v988, 0.0
      %v1198 = vadd.f32 %v986, %v1197
      %1199 = vadd.xlane.f32.xlu0 %v1198
      %v1200 = vpop.xlane.xlu0 %1199
      %v1201 = vsel %vm1008, %v994, 0.0
      %v1202 = vadd.f32 %v992, %v1201
      %1203 = vadd.xlane.f32.xlu0 %v1202
      %v1204 = vpop.xlane.xlu0 %1203
      %v1205 = vsel %vm1008, %v998, 0.0
      %v1206 = vadd.f32 %v996, %v1205
      %1207 = vadd.xlane.f32.xlu0 %v1206
      %v1208 = vpop.xlane.xlu0 %1207
      %v1209 = vsel %vm1008, %v1004, 0.0
      %v1210 = vadd.f32 %v1002, %v1209
      %1211 = vadd.xlane.f32.xlu0 %v1210
      %v1212 = vpop.xlane.xlu0 %1211
      %v1213 = vmul.f32 %v752, %v752
      %v1214 = vmul.f32 %v754, %v754
      %v1215 = vmul.f32 %v756, %v756
      %v1216 = vmul.f32 %v758, %v758
      %v1217 = vmul.f32 %v762, %v762
      %v1218 = vmul.f32 %v764, %v764
      %v1219 = vmul.f32 %v766, %v766
      %v1220 = vmul.f32 %v768, %v768
      %v1221 = vmul.f32 %v772, %v772
      %v1222 = vmul.f32 %v774, %v774
      %v1223 = vmul.f32 %v776, %v776
      %v1224 = vmul.f32 %v778, %v778
      %v1225 = vmul.f32 %v782, %v782
      %v1226 = vmul.f32 %v784, %v784
      %v1227 = vmul.f32 %v786, %v786
      %v1228 = vmul.f32 %v788, %v788
      %v1229 = vmul.f32 %v792, %v792
      %v1230 = vmul.f32 %v794, %v794
      %v1231 = vmul.f32 %v796, %v796
      %v1232 = vmul.f32 %v798, %v798
      %v1233 = vmul.f32 %v802, %v802
      %v1234 = vmul.f32 %v804, %v804
      %v1235 = vmul.f32 %v806, %v806
      %v1236 = vmul.f32 %v808, %v808
      %v1237 = vmul.f32 %v812, %v812
      %v1238 = vmul.f32 %v814, %v814
      %v1239 = vmul.f32 %v816, %v816
      %v1240 = vmul.f32 %v818, %v818
      %v1241 = vmul.f32 %v822, %v822
      %v1242 = vmul.f32 %v824, %v824
      %v1243 = vmul.f32 %v826, %v826
      %v1244 = vmul.f32 %v828, %v828
      %v1245 = vmul.f32 %v832, %v832
      %v1246 = vmul.f32 %v834, %v834
      %v1247 = vmul.f32 %v836, %v836
      %v1248 = vmul.f32 %v838, %v838
      %v1249 = vmul.f32 %v842, %v842
      %v1250 = vmul.f32 %v844, %v844
      %v1251 = vmul.f32 %v846, %v846
      %v1252 = vmul.f32 %v848, %v848
      %v1253 = vmul.f32 %v852, %v852
      %v1254 = vmul.f32 %v854, %v854
      %v1255 = vmul.f32 %v856, %v856
      %v1256 = vmul.f32 %v858, %v858
      %v1257 = vmul.f32 %v862, %v862
      %v1258 = vmul.f32 %v864, %v864
      %v1259 = vmul.f32 %v866, %v866
      %v1260 = vmul.f32 %v868, %v868
      %v1261 = vmul.f32 %v872, %v872
      %v1262 = vmul.f32 %v874, %v874
      %v1263 = vmul.f32 %v876, %v876
      %v1264 = vmul.f32 %v878, %v878
      %v1265 = vmul.f32 %v882, %v882
      %v1266 = vmul.f32 %v884, %v884
      %v1267 = vmul.f32 %v886, %v886
      %v1268 = vmul.f32 %v888, %v888
      %v1269 = vmul.f32 %v892, %v892
      %v1270 = vmul.f32 %v894, %v894
      %v1271 = vmul.f32 %v896, %v896
      %v1272 = vmul.f32 %v898, %v898
      %v1273 = vmul.f32 %v902, %v902
      %v1274 = vmul.f32 %v904, %v904
      %v1275 = vmul.f32 %v906, %v906
      %v1276 = vmul.f32 %v908, %v908
      %v1277 = vmul.f32 %v912, %v912
      %v1278 = vmul.f32 %v914, %v914
      %v1279 = vmul.f32 %v916, %v916
      %v1280 = vmul.f32 %v918, %v918
      %v1281 = vmul.f32 %v922, %v922
      %v1282 = vmul.f32 %v924, %v924
      %v1283 = vmul.f32 %v926, %v926
      %v1284 = vmul.f32 %v928, %v928
      %v1285 = vmul.f32 %v932, %v932
      %v1286 = vmul.f32 %v934, %v934
      %v1287 = vmul.f32 %v936, %v936
      %v1288 = vmul.f32 %v938, %v938
      %v1289 = vmul.f32 %v942, %v942
      %v1290 = vmul.f32 %v944, %v944
      %v1291 = vmul.f32 %v946, %v946
      %v1292 = vmul.f32 %v948, %v948
      %v1293 = vmul.f32 %v952, %v952
      %v1294 = vmul.f32 %v954, %v954
      %v1295 = vmul.f32 %v956, %v956
      %v1296 = vmul.f32 %v958, %v958
      %v1297 = vmul.f32 %v962, %v962
      %v1298 = vmul.f32 %v964, %v964
      %v1299 = vmul.f32 %v966, %v966
      %v1300 = vmul.f32 %v968, %v968
      %v1301 = vmul.f32 %v972, %v972
      %v1302 = vmul.f32 %v974, %v974
      %v1303 = vmul.f32 %v976, %v976
      %v1304 = vmul.f32 %v978, %v978
      %v1305 = vmul.f32 %v982, %v982
      %v1306 = vmul.f32 %v984, %v984
      %v1307 = vmul.f32 %v986, %v986
      %v1308 = vmul.f32 %v988, %v988
      %v1309 = vmul.f32 %v992, %v992
      %v1310 = vmul.f32 %v994, %v994
      %v1311 = vmul.f32 %v996, %v996
      %v1312 = vmul.f32 %v998, %v998
      %v1313 = vmul.f32 %v1002, %v1002
      %v1314 = vmul.f32 %v1004, %v1004
      %v1315 = vsel %vm1008, %v1214, 0.0
      %v1316 = vadd.f32 %v1213, %v1315
      %1317 = vadd.xlane.f32.xlu0 %v1316
      %v1318 = vpop.xlane.xlu0 %1317
      %v1319 = vsel %vm1008, %v1216, 0.0
      %v1320 = vadd.f32 %v1215, %v1319
      %1321 = vadd.xlane.f32.xlu0 %v1320
      %v1322 = vpop.xlane.xlu0 %1321
      %v1323 = vsel %vm1008, %v1218, 0.0
      %v1324 = vadd.f32 %v1217, %v1323
      %1325 = vadd.xlane.f32.xlu0 %v1324
      %v1326 = vpop.xlane.xlu0 %1325
      %v1327 = vsel %vm1008, %v1220, 0.0
      %v1328 = vadd.f32 %v1219, %v1327
      %1329 = vadd.xlane.f32.xlu0 %v1328
      %v1330 = vpop.xlane.xlu0 %1329
      %v1331 = vsel %vm1008, %v1222, 0.0
      %v1332 = vadd.f32 %v1221, %v1331
      %1333 = vadd.xlane.f32.xlu0 %v1332
      %v1334 = vpop.xlane.xlu0 %1333
      %v1335 = vsel %vm1008, %v1224, 0.0
      %v1336 = vadd.f32 %v1223, %v1335
      %1337 = vadd.xlane.f32.xlu0 %v1336
      %v1338 = vpop.xlane.xlu0 %1337
      %v1339 = vsel %vm1008, %v1226, 0.0
      %v1340 = vadd.f32 %v1225, %v1339
      %1341 = vadd.xlane.f32.xlu0 %v1340
      %v1342 = vpop.xlane.xlu0 %1341
      %v1343 = vsel %vm1008, %v1228, 0.0
      %v1344 = vadd.f32 %v1227, %v1343
      %1345 = vadd.xlane.f32.xlu0 %v1344
      %v1346 = vpop.xlane.xlu0 %1345
      %v1347 = vsel %vm1008, %v1230, 0.0
      %v1348 = vadd.f32 %v1229, %v1347
      %1349 = vadd.xlane.f32.xlu0 %v1348
      %v1350 = vpop.xlane.xlu0 %1349
      %v1351 = vsel %vm1008, %v1232, 0.0
      %v1352 = vadd.f32 %v1231, %v1351
      %1353 = vadd.xlane.f32.xlu0 %v1352
      %v1354 = vpop.xlane.xlu0 %1353
      %v1355 = vsel %vm1008, %v1234, 0.0
      %v1356 = vadd.f32 %v1233, %v1355
      %1357 = vadd.xlane.f32.xlu0 %v1356
      %v1358 = vpop.xlane.xlu0 %1357
      %v1359 = vsel %vm1008, %v1236, 0.0
      %v1360 = vadd.f32 %v1235, %v1359
      %1361 = vadd.xlane.f32.xlu0 %v1360
      %v1362 = vpop.xlane.xlu0 %1361
      %v1363 = vsel %vm1008, %v1238, 0.0
      %v1364 = vadd.f32 %v1237, %v1363
      %1365 = vadd.xlane.f32.xlu0 %v1364
      %v1366 = vpop.xlane.xlu0 %1365
      %v1367 = vsel %vm1008, %v1240, 0.0
      %v1368 = vadd.f32 %v1239, %v1367
      %1369 = vadd.xlane.f32.xlu0 %v1368
      %v1370 = vpop.xlane.xlu0 %1369
      %v1371 = vsel %vm1008, %v1242, 0.0
      %v1372 = vadd.f32 %v1241, %v1371
      %1373 = vadd.xlane.f32.xlu0 %v1372
      %v1374 = vpop.xlane.xlu0 %1373
      %v1375 = vsel %vm1008, %v1244, 0.0
      %v1376 = vadd.f32 %v1243, %v1375
      %1377 = vadd.xlane.f32.xlu0 %v1376
      %v1378 = vpop.xlane.xlu0 %1377
      %v1379 = vsel %vm1008, %v1246, 0.0
      %v1380 = vadd.f32 %v1245, %v1379
      %1381 = vadd.xlane.f32.xlu0 %v1380
      %v1382 = vpop.xlane.xlu0 %1381
      %v1383 = vsel %vm1008, %v1248, 0.0
      %v1384 = vadd.f32 %v1247, %v1383
      %1385 = vadd.xlane.f32.xlu0 %v1384
      %v1386 = vpop.xlane.xlu0 %1385
      %v1387 = vsel %vm1008, %v1250, 0.0
      %v1388 = vadd.f32 %v1249, %v1387
      %1389 = vadd.xlane.f32.xlu0 %v1388
      %v1390 = vpop.xlane.xlu0 %1389
      %v1391 = vsel %vm1008, %v1252, 0.0
      %v1392 = vadd.f32 %v1251, %v1391
      %1393 = vadd.xlane.f32.xlu0 %v1392
      %v1394 = vpop.xlane.xlu0 %1393
      %v1395 = vsel %vm1008, %v1254, 0.0
      %v1396 = vadd.f32 %v1253, %v1395
      %1397 = vadd.xlane.f32.xlu0 %v1396
      %v1398 = vpop.xlane.xlu0 %1397
      %v1399 = vsel %vm1008, %v1256, 0.0
      %v1400 = vadd.f32 %v1255, %v1399
      %1401 = vadd.xlane.f32.xlu0 %v1400
      %v1402 = vpop.xlane.xlu0 %1401
      %v1403 = vsel %vm1008, %v1258, 0.0
      %v1404 = vadd.f32 %v1257, %v1403
      %1405 = vadd.xlane.f32.xlu0 %v1404
      %v1406 = vpop.xlane.xlu0 %1405
      %v1407 = vsel %vm1008, %v1260, 0.0
      %v1408 = vadd.f32 %v1259, %v1407
      %1409 = vadd.xlane.f32.xlu0 %v1408
      %v1410 = vpop.xlane.xlu0 %1409
      %v1411 = vsel %vm1008, %v1262, 0.0
      %v1412 = vadd.f32 %v1261, %v1411
      %1413 = vadd.xlane.f32.xlu0 %v1412
      %v1414 = vpop.xlane.xlu0 %1413
      %v1415 = vsel %vm1008, %v1264, 0.0
      %v1416 = vadd.f32 %v1263, %v1415
      %1417 = vadd.xlane.f32.xlu0 %v1416
      %v1418 = vpop.xlane.xlu0 %1417
      %v1419 = vsel %vm1008, %v1266, 0.0
      %v1420 = vadd.f32 %v1265, %v1419
      %1421 = vadd.xlane.f32.xlu0 %v1420
      %v1422 = vpop.xlane.xlu0 %1421
      %v1423 = vsel %vm1008, %v1268, 0.0
      %v1424 = vadd.f32 %v1267, %v1423
      %1425 = vadd.xlane.f32.xlu0 %v1424
      %v1426 = vpop.xlane.xlu0 %1425
      %v1427 = vsel %vm1008, %v1270, 0.0
      %v1428 = vadd.f32 %v1269, %v1427
      %1429 = vadd.xlane.f32.xlu0 %v1428
      %v1430 = vpop.xlane.xlu0 %1429
      %v1431 = vsel %vm1008, %v1272, 0.0
      %v1432 = vadd.f32 %v1271, %v1431
      %1433 = vadd.xlane.f32.xlu0 %v1432
      %v1434 = vpop.xlane.xlu0 %1433
      %v1435 = vsel %vm1008, %v1274, 0.0
      %v1436 = vadd.f32 %v1273, %v1435
      %1437 = vadd.xlane.f32.xlu0 %v1436
      %v1438 = vpop.xlane.xlu0 %1437
      %v1439 = vsel %vm1008, %v1276, 0.0
      %v1440 = vadd.f32 %v1275, %v1439
      %1441 = vadd.xlane.f32.xlu0 %v1440
      %v1442 = vpop.xlane.xlu0 %1441
      %v1443 = vsel %vm1008, %v1278, 0.0
      %v1444 = vadd.f32 %v1277, %v1443
      %1445 = vadd.xlane.f32.xlu0 %v1444
      %v1446 = vpop.xlane.xlu0 %1445
      %v1447 = vsel %vm1008, %v1280, 0.0
      %v1448 = vadd.f32 %v1279, %v1447
      %1449 = vadd.xlane.f32.xlu0 %v1448
      %v1450 = vpop.xlane.xlu0 %1449
      %v1451 = vsel %vm1008, %v1282, 0.0
      %v1452 = vadd.f32 %v1281, %v1451
      %1453 = vadd.xlane.f32.xlu0 %v1452
      %v1454 = vpop.xlane.xlu0 %1453
      %v1455 = vsel %vm1008, %v1284, 0.0
      %v1456 = vadd.f32 %v1283, %v1455
      %1457 = vadd.xlane.f32.xlu0 %v1456
      %v1458 = vpop.xlane.xlu0 %1457
      %v1459 = vsel %vm1008, %v1286, 0.0
      %v1460 = vadd.f32 %v1285, %v1459
      %1461 = vadd.xlane.f32.xlu0 %v1460
      %v1462 = vpop.xlane.xlu0 %1461
      %v1463 = vsel %vm1008, %v1288, 0.0
      %v1464 = vadd.f32 %v1287, %v1463
      %1465 = vadd.xlane.f32.xlu0 %v1464
      %v1466 = vpop.xlane.xlu0 %1465
      %v1467 = vsel %vm1008, %v1290, 0.0
      %v1468 = vadd.f32 %v1289, %v1467
      %1469 = vadd.xlane.f32.xlu0 %v1468
      %v1470 = vpop.xlane.xlu0 %1469
      %v1471 = vsel %vm1008, %v1292, 0.0
      %v1472 = vadd.f32 %v1291, %v1471
      %1473 = vadd.xlane.f32.xlu0 %v1472
      %v1474 = vpop.xlane.xlu0 %1473
      %v1475 = vsel %vm1008, %v1294, 0.0
      %v1476 = vadd.f32 %v1293, %v1475
      %1477 = vadd.xlane.f32.xlu0 %v1476
      %v1478 = vpop.xlane.xlu0 %1477
      %v1479 = vsel %vm1008, %v1296, 0.0
      %v1480 = vadd.f32 %v1295, %v1479
      %1481 = vadd.xlane.f32.xlu0 %v1480
      %v1482 = vpop.xlane.xlu0 %1481
      %v1483 = vsel %vm1008, %v1298, 0.0
      %v1484 = vadd.f32 %v1297, %v1483
      %1485 = vadd.xlane.f32.xlu0 %v1484
      %v1486 = vpop.xlane.xlu0 %1485
      %v1487 = vsel %vm1008, %v1300, 0.0
      %v1488 = vadd.f32 %v1299, %v1487
      %1489 = vadd.xlane.f32.xlu0 %v1488
      %v1490 = vpop.xlane.xlu0 %1489
      %v1491 = vsel %vm1008, %v1302, 0.0
      %v1492 = vadd.f32 %v1301, %v1491
      %1493 = vadd.xlane.f32.xlu0 %v1492
      %v1494 = vpop.xlane.xlu0 %1493
      %v1495 = vsel %vm1008, %v1304, 0.0
      %v1496 = vadd.f32 %v1303, %v1495
      %1497 = vadd.xlane.f32.xlu0 %v1496
      %v1498 = vpop.xlane.xlu0 %1497
      %v1499 = vsel %vm1008, %v1306, 0.0
      %v1500 = vadd.f32 %v1305, %v1499
      %1501 = vadd.xlane.f32.xlu0 %v1500
      %v1502 = vpop.xlane.xlu0 %1501
      %v1503 = vsel %vm1008, %v1308, 0.0
      %v1504 = vadd.f32 %v1307, %v1503
      %1505 = vadd.xlane.f32.xlu0 %v1504
      %v1506 = vpop.xlane.xlu0 %1505
      %v1507 = vsel %vm1008, %v1310, 0.0
      %v1508 = vadd.f32 %v1309, %v1507
      %1509 = vadd.xlane.f32.xlu0 %v1508
      %v1510 = vpop.xlane.xlu0 %1509
      %v1511 = vsel %vm1008, %v1312, 0.0
      %v1512 = vadd.f32 %v1311, %v1511
      %1513 = vadd.xlane.f32.xlu0 %v1512
      %v1514 = vpop.xlane.xlu0 %1513
      %v1515 = vsel %vm1008, %v1314, 0.0
      %v1516 = vadd.f32 %v1313, %v1515
      %1517 = vadd.xlane.f32.xlu0 %v1516
      %v1518 = vpop.xlane.xlu0 %1517
      %v1519 = vmul.f32 %v1012, 0.0051020407
      %v1520 = vmul.f32 %v1016, 0.0051020407
      %v1521 = vmul.f32 %v1020, 0.0051020407
      %v1522 = vmul.f32 %v1024, 0.0051020407
      %v1523 = vmul.f32 %v1028, 0.0051020407
      %v1524 = vmul.f32 %v1032, 0.0051020407
      %v1525 = vmul.f32 %v1036, 0.0051020407
      %v1526 = vmul.f32 %v1040, 0.0051020407
      %v1527 = vmul.f32 %v1044, 0.0051020407
      %v1528 = vmul.f32 %v1048, 0.0051020407
      %v1529 = vmul.f32 %v1052, 0.0051020407
      %v1530 = vmul.f32 %v1056, 0.0051020407
      %v1531 = vmul.f32 %v1060, 0.0051020407
      %v1532 = vmul.f32 %v1064, 0.0051020407
      %v1533 = vmul.f32 %v1068, 0.0051020407
      %v1534 = vmul.f32 %v1072, 0.0051020407
      %v1535 = vmul.f32 %v1076, 0.0051020407
      %v1536 = vmul.f32 %v1080, 0.0051020407
      %v1537 = vmul.f32 %v1084, 0.0051020407
      %v1538 = vmul.f32 %v1088, 0.0051020407
      %v1539 = vmul.f32 %v1092, 0.0051020407
      %v1540 = vmul.f32 %v1096, 0.0051020407
      %v1541 = vmul.f32 %v1100, 0.0051020407
      %v1542 = vmul.f32 %v1104, 0.0051020407
      %v1543 = vmul.f32 %v1108, 0.0051020407
      %v1544 = vmul.f32 %v1112, 0.0051020407
      %v1545 = vmul.f32 %v1116, 0.0051020407
      %v1546 = vmul.f32 %v1120, 0.0051020407
      %v1547 = vmul.f32 %v1124, 0.0051020407
      %v1548 = vmul.f32 %v1128, 0.0051020407
      %v1549 = vmul.f32 %v1132, 0.0051020407
      %v1550 = vmul.f32 %v1136, 0.0051020407
      %v1551 = vmul.f32 %v1140, 0.0051020407
      %v1552 = vmul.f32 %v1144, 0.0051020407
      %v1553 = vmul.f32 %v1148, 0.0051020407
      %v1554 = vmul.f32 %v1152, 0.0051020407
      %v1555 = vmul.f32 %v1156, 0.0051020407
      %v1556 = vmul.f32 %v1160, 0.0051020407
      %v1557 = vmul.f32 %v1164, 0.0051020407
      %v1558 = vmul.f32 %v1168, 0.0051020407
      %v1559 = vmul.f32 %v1172, 0.0051020407
      %v1560 = vmul.f32 %v1176, 0.0051020407
      %v1561 = vmul.f32 %v1180, 0.0051020407
      %v1562 = vmul.f32 %v1184, 0.0051020407
      %v1563 = vmul.f32 %v1188, 0.0051020407
      %v1564 = vmul.f32 %v1192, 0.0051020407
      %v1565 = vmul.f32 %v1196, 0.0051020407
      %v1566 = vmul.f32 %v1200, 0.0051020407
      %v1567 = vmul.f32 %v1204, 0.0051020407
      %v1568 = vmul.f32 %v1208, 0.0051020407
      %v1569 = vmul.f32 %v1212, 0.0051020407
      %v1570 = vmul.f32 %v1318, 0.0051020407
      %v1571 = vmul.f32 %v1322, 0.0051020407
      %v1572 = vmul.f32 %v1326, 0.0051020407
      %v1573 = vmul.f32 %v1330, 0.0051020407
      %v1574 = vmul.f32 %v1334, 0.0051020407
      %v1575 = vmul.f32 %v1338, 0.0051020407
      %v1576 = vmul.f32 %v1342, 0.0051020407
      %v1577 = vmul.f32 %v1346, 0.0051020407
      %v1578 = vmul.f32 %v1350, 0.0051020407
      %v1579 = vmul.f32 %v1354, 0.0051020407
      %v1580 = vmul.f32 %v1358, 0.0051020407
      %v1581 = vmul.f32 %v1362, 0.0051020407
      %v1582 = vmul.f32 %v1366, 0.0051020407
      %v1583 = vmul.f32 %v1370, 0.0051020407
      %v1584 = vmul.f32 %v1374, 0.0051020407
      %v1585 = vmul.f32 %v1378, 0.0051020407
      %v1586 = vmul.f32 %v1382, 0.0051020407
      %v1587 = vmul.f32 %v1386, 0.0051020407
      %v1588 = vmul.f32 %v1390, 0.0051020407
      %v1589 = vmul.f32 %v1394, 0.0051020407
      %v1590 = vmul.f32 %v1398, 0.0051020407
      %v1591 = vmul.f32 %v1402, 0.0051020407
      %v1592 = vmul.f32 %v1406, 0.0051020407
      %v1593 = vmul.f32 %v1410, 0.0051020407
      %v1594 = vmul.f32 %v1414, 0.0051020407
      %v1595 = vmul.f32 %v1418, 0.0051020407
      %v1596 = vmul.f32 %v1422, 0.0051020407
      %v1597 = vmul.f32 %v1426, 0.0051020407
      %v1598 = vmul.f32 %v1430, 0.0051020407
      %v1599 = vmul.f32 %v1434, 0.0051020407
      %v1600 = vmul.f32 %v1438, 0.0051020407
      %v1601 = vmul.f32 %v1442, 0.0051020407
      %v1602 = vmul.f32 %v1446, 0.0051020407
      %v1603 = vmul.f32 %v1450, 0.0051020407
      %v1604 = vmul.f32 %v1454, 0.0051020407
      %v1605 = vmul.f32 %v1458, 0.0051020407
      %v1606 = vmul.f32 %v1462, 0.0051020407
      %v1607 = vmul.f32 %v1466, 0.0051020407
      %v1608 = vmul.f32 %v1470, 0.0051020407
      %v1609 = vmul.f32 %v1474, 0.0051020407
      %v1610 = vmul.f32 %v1478, 0.0051020407
      %v1611 = vmul.f32 %v1482, 0.0051020407
      %v1612 = vmul.f32 %v1486, 0.0051020407
      %v1613 = vmul.f32 %v1490, 0.0051020407
      %v1614 = vmul.f32 %v1494, 0.0051020407
      %v1615 = vmul.f32 %v1498, 0.0051020407
      %v1616 = vmul.f32 %v1502, 0.0051020407
      %v1617 = vmul.f32 %v1506, 0.0051020407
      %v1618 = vmul.f32 %v1510, 0.0051020407
      %v1619 = vmul.f32 %v1514, 0.0051020407
      %v1620 = vmul.f32 %v1518, 0.0051020407
      %v1621 = vmul.f32 %v1519, %v1519
      %v1622 = vmul.f32 %v1520, %v1520
      %v1623 = vmul.f32 %v1521, %v1521
      %v1624 = vmul.f32 %v1522, %v1522
      %v1625 = vmul.f32 %v1523, %v1523
      %v1626 = vmul.f32 %v1524, %v1524
      %v1627 = vmul.f32 %v1525, %v1525
      %v1628 = vmul.f32 %v1526, %v1526
      %v1629 = vmul.f32 %v1527, %v1527
      %v1630 = vmul.f32 %v1528, %v1528
      %v1631 = vmul.f32 %v1529, %v1529
      %v1632 = vmul.f32 %v1530, %v1530
      %v1633 = vmul.f32 %v1531, %v1531
      %v1634 = vmul.f32 %v1532, %v1532
      %v1635 = vmul.f32 %v1533, %v1533
      %v1636 = vmul.f32 %v1534, %v1534
      %v1637 = vmul.f32 %v1535, %v1535
      %v1638 = vmul.f32 %v1536, %v1536
      %v1639 = vmul.f32 %v1537, %v1537
      %v1640 = vmul.f32 %v1538, %v1538
      %v1641 = vmul.f32 %v1539, %v1539
      %v1642 = vmul.f32 %v1540, %v1540
      %v1643 = vmul.f32 %v1541, %v1541
      %v1644 = vmul.f32 %v1542, %v1542
      %v1645 = vmul.f32 %v1543, %v1543
      %v1646 = vmul.f32 %v1544, %v1544
      %v1647 = vmul.f32 %v1545, %v1545
      %v1648 = vmul.f32 %v1546, %v1546
      %v1649 = vmul.f32 %v1547, %v1547
      %v1650 = vmul.f32 %v1548, %v1548
      %v1651 = vmul.f32 %v1549, %v1549
      %v1652 = vmul.f32 %v1550, %v1550
      %v1653 = vmul.f32 %v1551, %v1551
      %v1654 = vmul.f32 %v1552, %v1552
      %v1655 = vmul.f32 %v1553, %v1553
      %v1656 = vmul.f32 %v1554, %v1554
      %v1657 = vmul.f32 %v1555, %v1555
      %v1658 = vmul.f32 %v1556, %v1556
      %v1659 = vmul.f32 %v1557, %v1557
      %v1660 = vmul.f32 %v1558, %v1558
      %v1661 = vmul.f32 %v1559, %v1559
      %v1662 = vmul.f32 %v1560, %v1560
      %v1663 = vmul.f32 %v1561, %v1561
      %v1664 = vmul.f32 %v1562, %v1562
      %v1665 = vmul.f32 %v1563, %v1563
      %v1666 = vmul.f32 %v1564, %v1564
      %v1667 = vmul.f32 %v1565, %v1565
      %v1668 = vmul.f32 %v1566, %v1566
      %v1669 = vmul.f32 %v1567, %v1567
      %v1670 = vmul.f32 %v1568, %v1568
      %v1671 = vmul.f32 %v1569, %v1569
      %v1672 = vsub.f32 %v1570, %v1621
      %v1673 = vsub.f32 %v1571, %v1622
      %v1674 = vsub.f32 %v1572, %v1623
      %v1675 = vsub.f32 %v1573, %v1624
      %v1676 = vsub.f32 %v1574, %v1625
      %v1677 = vsub.f32 %v1575, %v1626
      %v1678 = vsub.f32 %v1576, %v1627
      %v1679 = vsub.f32 %v1577, %v1628
      %v1680 = vsub.f32 %v1578, %v1629
      %v1681 = vsub.f32 %v1579, %v1630
      %v1682 = vsub.f32 %v1580, %v1631
      %v1683 = vsub.f32 %v1581, %v1632
      %v1684 = vsub.f32 %v1582, %v1633
      %v1685 = vsub.f32 %v1583, %v1634
      %v1686 = vsub.f32 %v1584, %v1635
      %v1687 = vsub.f32 %v1585, %v1636
      %v1688 = vsub.f32 %v1586, %v1637
      %v1689 = vsub.f32 %v1587, %v1638
      %v1690 = vsub.f32 %v1588, %v1639
      %v1691 = vsub.f32 %v1589, %v1640
      %v1692 = vsub.f32 %v1590, %v1641
      %v1693 = vsub.f32 %v1591, %v1642
      %v1694 = vsub.f32 %v1592, %v1643
      %v1695 = vsub.f32 %v1593, %v1644
      %v1696 = vsub.f32 %v1594, %v1645
      %v1697 = vsub.f32 %v1595, %v1646
      %v1698 = vsub.f32 %v1596, %v1647
      %v1699 = vsub.f32 %v1597, %v1648
      %v1700 = vsub.f32 %v1598, %v1649
      %v1701 = vsub.f32 %v1599, %v1650
      %v1702 = vsub.f32 %v1600, %v1651
      %v1703 = vsub.f32 %v1601, %v1652
      %v1704 = vsub.f32 %v1602, %v1653
      %v1705 = vsub.f32 %v1603, %v1654
      %v1706 = vsub.f32 %v1604, %v1655
      %v1707 = vsub.f32 %v1605, %v1656
      %v1708 = vsub.f32 %v1606, %v1657
      %v1709 = vsub.f32 %v1607, %v1658
      %v1710 = vsub.f32 %v1608, %v1659
      %v1711 = vsub.f32 %v1609, %v1660
      %v1712 = vsub.f32 %v1610, %v1661
      %v1713 = vsub.f32 %v1611, %v1662
      %v1714 = vsub.f32 %v1612, %v1663
      %v1715 = vsub.f32 %v1613, %v1664
      %v1716 = vsub.f32 %v1614, %v1665
      %v1717 = vsub.f32 %v1615, %v1666
      %v1718 = vsub.f32 %v1616, %v1667
      %v1719 = vsub.f32 %v1617, %v1668
      %v1720 = vsub.f32 %v1618, %v1669
      %v1721 = vsub.f32 %v1619, %v1670
      %v1722 = vsub.f32 %v1620, %v1671
      %v1723 = vmax.f32 %v1672, 0.0
      %v1724 = vmax.f32 %v1673, 0.0
      %v1725 = vmax.f32 %v1674, 0.0
      %v1726 = vmax.f32 %v1675, 0.0
      %v1727 = vmax.f32 %v1676, 0.0
      %v1728 = vmax.f32 %v1677, 0.0
      %v1729 = vmax.f32 %v1678, 0.0
      %v1730 = vmax.f32 %v1679, 0.0
      %v1731 = vmax.f32 %v1680, 0.0
      %v1732 = vmax.f32 %v1681, 0.0
      %v1733 = vmax.f32 %v1682, 0.0
      %v1734 = vmax.f32 %v1683, 0.0
      %v1735 = vmax.f32 %v1684, 0.0
      %v1736 = vmax.f32 %v1685, 0.0
      %v1737 = vmax.f32 %v1686, 0.0
      %v1738 = vmax.f32 %v1687, 0.0
      %v1739 = vmax.f32 %v1688, 0.0
      %v1740 = vmax.f32 %v1689, 0.0
      %v1741 = vmax.f32 %v1690, 0.0
      %v1742 = vmax.f32 %v1691, 0.0
      %v1743 = vmax.f32 %v1692, 0.0
      %v1744 = vmax.f32 %v1693, 0.0
      %v1745 = vmax.f32 %v1694, 0.0
      %v1746 = vmax.f32 %v1695, 0.0
      %v1747 = vmax.f32 %v1696, 0.0
      %v1748 = vmax.f32 %v1697, 0.0
      %v1749 = vmax.f32 %v1698, 0.0
      %v1750 = vmax.f32 %v1699, 0.0
      %v1751 = vmax.f32 %v1700, 0.0
      %v1752 = vmax.f32 %v1701, 0.0
      %v1753 = vmax.f32 %v1702, 0.0
      %v1754 = vmax.f32 %v1703, 0.0
      %v1755 = vmax.f32 %v1704, 0.0
      %v1756 = vmax.f32 %v1705, 0.0
      %v1757 = vmax.f32 %v1706, 0.0
      %v1758 = vmax.f32 %v1707, 0.0
      %v1759 = vmax.f32 %v1708, 0.0
      %v1760 = vmax.f32 %v1709, 0.0
      %v1761 = vmax.f32 %v1710, 0.0
      %v1762 = vmax.f32 %v1711, 0.0
      %v1763 = vmax.f32 %v1712, 0.0
      %v1764 = vmax.f32 %v1713, 0.0
      %v1765 = vmax.f32 %v1714, 0.0
      %v1766 = vmax.f32 %v1715, 0.0
      %v1767 = vmax.f32 %v1716, 0.0
      %v1768 = vmax.f32 %v1717, 0.0
      %v1769 = vmax.f32 %v1718, 0.0
      %v1770 = vmax.f32 %v1719, 0.0
      %v1771 = vmax.f32 %v1720, 0.0
      %v1772 = vmax.f32 %v1721, 0.0
      %v1773 = vmax.f32 %v1722, 0.0
      %v1774 = vld [vmem:[%s219] sm:$0xff]
      %v1775 = vld [vmem:[%s219 + $0x8] sm:$0xff]
      %v1776 = vld [vmem:[%s219 + $0x10] sm:$0xff]
      %v1777 = vld [vmem:[%s219 + $0x18] sm:$0xff]
      %v1778 = vld [vmem:[%s219 + $0x20] sm:$0xff]
      %v1779 = vld [vmem:[%s219 + $0x28] sm:$0xff]
      %v1780 = vld [vmem:[%s219 + $0x30] sm:$0xff]
      %v1781 = vld [vmem:[%s219 + $0x38] sm:$0xff]
      %v1782 = vld [vmem:[%s219 + $0x40] sm:$0xff]
      %v1783 = vld [vmem:[%s219 + $0x48] sm:$0xff]
      %v1784 = vld [vmem:[%s219 + $0x50] sm:$0xff]
      %v1785 = vld [vmem:[%s219 + $0x58] sm:$0xff]
      %v1786 = vld [vmem:[%s219 + $0x60] sm:$0xff]
      %v1787 = vld [vmem:[%s219 + $0x68] sm:$0xff]
      %v1788 = vld [vmem:[%s219 + $0x70] sm:$0xff]
      %v1789 = vld [vmem:[%s219 + $0x78] sm:$0xff]
      %v1790 = vld [vmem:[%s219 + $0x80] sm:$0xff]
      %v1791 = vld [vmem:[%s219 + $0x88] sm:$0xff]
      %v1792 = vld [vmem:[%s219 + $0x90] sm:$0xff]
      %v1793 = vld [vmem:[%s219 + $0x98] sm:$0xff]
      %v1794 = vld [vmem:[%s219 + $0xa0] sm:$0xff]
      %v1795 = vld [vmem:[%s219 + $0xa8] sm:$0xff]
      %v1796 = vld [vmem:[%s219 + $0xb0] sm:$0xff]
      %v1797 = vld [vmem:[%s219 + $0xb8] sm:$0xff]
      %v1798 = vld [vmem:[%s219 + $0xc0] sm:$0xff]
      %v1799 = vld [vmem:[%s219 + $0xc8] sm:$0xff]
      %v1800 = vld [vmem:[%s219 + $0xd0] sm:$0xff]
      %v1801 = vld [vmem:[%s219 + $0xd8] sm:$0xff]
      %v1802 = vld [vmem:[%s219 + $0xe0] sm:$0xff]
      %v1803 = vld [vmem:[%s219 + $0xe8] sm:$0xff]
      %v1804 = vld [vmem:[%s219 + $0xf0] sm:$0xff]
      %v1805 = vld [vmem:[%s219 + $0xf8] sm:$0xff]
      %v1806 = vld [vmem:[%s219 + $0x100] sm:$0xff]
      %v1807 = vld [vmem:[%s219 + $0x108] sm:$0xff]
      %v1808 = vld [vmem:[%s219 + $0x110] sm:$0xff]
      %v1809 = vld [vmem:[%s219 + $0x118] sm:$0xff]
      %v1810 = vld [vmem:[%s219 + $0x120] sm:$0xff]
      %v1811 = vld [vmem:[%s219 + $0x128] sm:$0xff]
      %v1812 = vld [vmem:[%s219 + $0x130] sm:$0xff]
      %v1813 = vld [vmem:[%s219 + $0x138] sm:$0xff]
      %v1814 = vld [vmem:[%s219 + $0x140] sm:$0xff]
      %v1815 = vld [vmem:[%s219 + $0x148] sm:$0xff]
      %v1816 = vld [vmem:[%s219 + $0x150] sm:$0xff]
      %v1817 = vld [vmem:[%s219 + $0x158] sm:$0xff]
      %v1818 = vld [vmem:[%s219 + $0x160] sm:$0xff]
      %v1819 = vld [vmem:[%s219 + $0x168] sm:$0xff]
      %v1820 = vld [vmem:[%s219 + $0x170] sm:$0xff]
      %v1821 = vld [vmem:[%s219 + $0x178] sm:$0xff]
      %v1822 = vld [vmem:[%s219 + $0x180] sm:$0xff]
      %v1823 = vld [vmem:[%s219 + $0x188] sm:$0xff]
      %v1824 = vld [vmem:[%s219 + $0x190] sm:$0xff]
      %v1825 = vadd.f32 %v1723, 1e-05
      %v1826 = vadd.f32 %v1724, 1e-05
      %v1827 = vadd.f32 %v1725, 1e-05
      %v1828 = vadd.f32 %v1726, 1e-05
      %v1829 = vadd.f32 %v1727, 1e-05
      %v1830 = vadd.f32 %v1728, 1e-05
      %v1831 = vadd.f32 %v1729, 1e-05
      %v1832 = vadd.f32 %v1730, 1e-05
      %v1833 = vadd.f32 %v1731, 1e-05
      %v1834 = vadd.f32 %v1732, 1e-05
      %v1835 = vadd.f32 %v1733, 1e-05
      %v1836 = vadd.f32 %v1734, 1e-05
      %v1837 = vadd.f32 %v1735, 1e-05
      %v1838 = vadd.f32 %v1736, 1e-05
      %v1839 = vadd.f32 %v1737, 1e-05
      %v1840 = vadd.f32 %v1738, 1e-05
      %v1841 = vadd.f32 %v1739, 1e-05
      %v1842 = vadd.f32 %v1740, 1e-05
      %v1843 = vadd.f32 %v1741, 1e-05
      %v1844 = vadd.f32 %v1742, 1e-05
      %v1845 = vadd.f32 %v1743, 1e-05
      %v1846 = vadd.f32 %v1744, 1e-05
      %v1847 = vadd.f32 %v1745, 1e-05
      %v1848 = vadd.f32 %v1746, 1e-05
      %v1849 = vadd.f32 %v1747, 1e-05
      %v1850 = vadd.f32 %v1748, 1e-05
      %v1851 = vadd.f32 %v1749, 1e-05
      %v1852 = vadd.f32 %v1750, 1e-05
      %v1853 = vadd.f32 %v1751, 1e-05
      %v1854 = vadd.f32 %v1752, 1e-05
      %v1855 = vadd.f32 %v1753, 1e-05
      %v1856 = vadd.f32 %v1754, 1e-05
      %v1857 = vadd.f32 %v1755, 1e-05
      %v1858 = vadd.f32 %v1756, 1e-05
      %v1859 = vadd.f32 %v1757, 1e-05
      %v1860 = vadd.f32 %v1758, 1e-05
      %v1861 = vadd.f32 %v1759, 1e-05
      %v1862 = vadd.f32 %v1760, 1e-05
      %v1863 = vadd.f32 %v1761, 1e-05
      %v1864 = vadd.f32 %v1762, 1e-05
      %v1865 = vadd.f32 %v1763, 1e-05
      %v1866 = vadd.f32 %v1764, 1e-05
      %v1867 = vadd.f32 %v1765, 1e-05
      %v1868 = vadd.f32 %v1766, 1e-05
      %v1869 = vadd.f32 %v1767, 1e-05
      %v1870 = vadd.f32 %v1768, 1e-05
      %v1871 = vadd.f32 %v1769, 1e-05
      %v1872 = vadd.f32 %v1770, 1e-05
      %v1873 = vadd.f32 %v1771, 1e-05
      %v1874 = vadd.f32 %v1772, 1e-05
      %v1875 = vadd.f32 %v1773, 1e-05
      %v1876 = vrsqrt.pop %v1825
      %v1877 = vrsqrt.pop %v1826
      %v1878 = vrsqrt.pop %v1827
      %v1879 = vrsqrt.pop %v1828
      %v1880 = vrsqrt.pop %v1829
      %v1881 = vrsqrt.pop %v1830
      %v1882 = vrsqrt.pop %v1831
      %v1883 = vrsqrt.pop %v1832
      %v1884 = vrsqrt.pop %v1833
      %v1885 = vrsqrt.pop %v1834
      %v1886 = vrsqrt.pop %v1835
      %v1887 = vrsqrt.pop %v1836
      %v1888 = vrsqrt.pop %v1837
      %v1889 = vrsqrt.pop %v1838
      %v1890 = vrsqrt.pop %v1839
      %v1891 = vrsqrt.pop %v1840
      %v1892 = vrsqrt.pop %v1841
      %v1893 = vrsqrt.pop %v1842
      %v1894 = vrsqrt.pop %v1843
      %v1895 = vrsqrt.pop %v1844
      %v1896 = vrsqrt.pop %v1845
      %v1897 = vrsqrt.pop %v1846
      %v1898 = vrsqrt.pop %v1847
      %v1899 = vrsqrt.pop %v1848
      %v1900 = vrsqrt.pop %v1849
      %v1901 = vrsqrt.pop %v1850
      %v1902 = vrsqrt.pop %v1851
      %v1903 = vrsqrt.pop %v1852
      %v1904 = vrsqrt.pop %v1853
      %v1905 = vrsqrt.pop %v1854
      %v1906 = vrsqrt.pop %v1855
      %v1907 = vrsqrt.pop %v1856
      %v1908 = vrsqrt.pop %v1857
      %v1909 = vrsqrt.pop %v1858
      %v1910 = vrsqrt.pop %v1859
      %v1911 = vrsqrt.pop %v1860
      %v1912 = vrsqrt.pop %v1861
      %v1913 = vrsqrt.pop %v1862
      %v1914 = vrsqrt.pop %v1863
      %v1915 = vrsqrt.pop %v1864
      %v1916 = vrsqrt.pop %v1865
      %v1917 = vrsqrt.pop %v1866
      %v1918 = vrsqrt.pop %v1867
      %v1919 = vrsqrt.pop %v1868
      %v1920 = vrsqrt.pop %v1869
      %v1921 = vrsqrt.pop %v1870
      %v1922 = vrsqrt.pop %v1871
      %v1923 = vrsqrt.pop %v1872
      %v1924 = vrsqrt.pop %v1873
      %v1925 = vrsqrt.pop %v1874
      %v1926 = vrsqrt.pop %v1875
      %v1927 = vmul.f32 %v1774, %v1876
      %v1928 = vmul.f32 %v1775, %v1877
      %v1929 = vmul.f32 %v1776, %v1878
      %v1930 = vmul.f32 %v1777, %v1879
      %v1931 = vmul.f32 %v1778, %v1880
      %v1932 = vmul.f32 %v1779, %v1881
      %v1933 = vmul.f32 %v1780, %v1882
      %v1934 = vmul.f32 %v1781, %v1883
      %v1935 = vmul.f32 %v1782, %v1884
      %v1936 = vmul.f32 %v1783, %v1885
      %v1937 = vmul.f32 %v1784, %v1886
      %v1938 = vmul.f32 %v1785, %v1887
      %v1939 = vmul.f32 %v1786, %v1888
      %v1940 = vmul.f32 %v1787, %v1889
      %v1941 = vmul.f32 %v1788, %v1890
      %v1942 = vmul.f32 %v1789, %v1891
      %v1943 = vmul.f32 %v1790, %v1892
      %v1944 = vmul.f32 %v1791, %v1893
      %v1945 = vmul.f32 %v1792, %v1894
      %v1946 = vmul.f32 %v1793, %v1895
      %v1947 = vmul.f32 %v1794, %v1896
      %v1948 = vmul.f32 %v1795, %v1897
      %v1949 = vmul.f32 %v1796, %v1898
      %v1950 = vmul.f32 %v1797, %v1899
      %v1951 = vmul.f32 %v1798, %v1900
      %v1952 = vmul.f32 %v1799, %v1901
      %v1953 = vmul.f32 %v1800, %v1902
      %v1954 = vmul.f32 %v1801, %v1903
      %v1955 = vmul.f32 %v1802, %v1904
      %v1956 = vmul.f32 %v1803, %v1905
      %v1957 = vmul.f32 %v1804, %v1906
      %v1958 = vmul.f32 %v1805, %v1907
      %v1959 = vmul.f32 %v1806, %v1908
      %v1960 = vmul.f32 %v1807, %v1909
      %v1961 = vmul.f32 %v1808, %v1910
      %v1962 = vmul.f32 %v1809, %v1911
      %v1963 = vmul.f32 %v1810, %v1912
      %v1964 = vmul.f32 %v1811, %v1913
      %v1965 = vmul.f32 %v1812, %v1914
      %v1966 = vmul.f32 %v1813, %v1915
      %v1967 = vmul.f32 %v1814, %v1916
      %v1968 = vmul.f32 %v1815, %v1917
      %v1969 = vmul.f32 %v1816, %v1918
      %v1970 = vmul.f32 %v1817, %v1919
      %v1971 = vmul.f32 %v1818, %v1920
      %v1972 = vmul.f32 %v1819, %v1921
      %v1973 = vmul.f32 %v1820, %v1922
      %v1974 = vmul.f32 %v1821, %v1923
      %v1975 = vmul.f32 %v1822, %v1924
      %v1976 = vmul.f32 %v1823, %v1925
      %v1977 = vmul.f32 %v1824, %v1926
      %v1978 = vmul.f32 %v1519, %v1927
      %v1979 = vmul.f32 %v1520, %v1928
      %v1980 = vmul.f32 %v1521, %v1929
      %v1981 = vmul.f32 %v1522, %v1930
      %v1982 = vmul.f32 %v1523, %v1931
      %v1983 = vmul.f32 %v1524, %v1932
      %v1984 = vmul.f32 %v1525, %v1933
      %v1985 = vmul.f32 %v1526, %v1934
      %v1986 = vmul.f32 %v1527, %v1935
      %v1987 = vmul.f32 %v1528, %v1936
      %v1988 = vmul.f32 %v1529, %v1937
      %v1989 = vmul.f32 %v1530, %v1938
      %v1990 = vmul.f32 %v1531, %v1939
      %v1991 = vmul.f32 %v1532, %v1940
      %v1992 = vmul.f32 %v1533, %v1941
      %v1993 = vmul.f32 %v1534, %v1942
      %v1994 = vmul.f32 %v1535, %v1943
      %v1995 = vmul.f32 %v1536, %v1944
      %v1996 = vmul.f32 %v1537, %v1945
      %v1997 = vmul.f32 %v1538, %v1946
      %v1998 = vmul.f32 %v1539, %v1947
      %v1999 = vmul.f32 %v1540, %v1948
      %v2000 = vmul.f32 %v1541, %v1949
      %v2001 = vmul.f32 %v1542, %v1950
      %v2002 = vmul.f32 %v1543, %v1951
      %v2003 = vmul.f32 %v1544, %v1952
      %v2004 = vmul.f32 %v1545, %v1953
      %v2005 = vmul.f32 %v1546, %v1954
      %v2006 = vmul.f32 %v1547, %v1955
      %v2007 = vmul.f32 %v1548, %v1956
      %v2008 = vmul.f32 %v1549, %v1957
      %v2009 = vmul.f32 %v1550, %v1958
      %v2010 = vmul.f32 %v1551, %v1959
      %v2011 = vmul.f32 %v1552, %v1960
      %v2012 = vmul.f32 %v1553, %v1961
      %v2013 = vmul.f32 %v1554, %v1962
      %v2014 = vmul.f32 %v1555, %v1963
      %v2015 = vmul.f32 %v1556, %v1964
      %v2016 = vmul.f32 %v1557, %v1965
      %v2017 = vmul.f32 %v1558, %v1966
      %v2018 = vmul.f32 %v1559, %v1967
      %v2019 = vmul.f32 %v1560, %v1968
      %v2020 = vmul.f32 %v1561, %v1969
      %v2021 = vmul.f32 %v1562, %v1970
      %v2022 = vmul.f32 %v1563, %v1971
      %v2023 = vmul.f32 %v1564, %v1972
      %v2024 = vmul.f32 %v1565, %v1973
      %v2025 = vmul.f32 %v1566, %v1974
      %v2026 = vmul.f32 %v1567, %v1975
      %v2027 = vmul.f32 %v1568, %v1976
      %v2028 = vmul.f32 %v1569, %v1977
      %2080 = vrot.lane.b32.xlu0 %v1978, 1
      %v2081 = vpop.permute.xlu0 %2080
      %2082 = vrot.lane.b32.xlu0 %v1979, 1
      %v2083 = vpop.permute.xlu0 %2082
      %2084 = vrot.lane.b32.xlu0 %v1980, 1
      %v2085 = vpop.permute.xlu0 %2084
      %2086 = vrot.lane.b32.xlu0 %v1981, 1
      %v2087 = vpop.permute.xlu0 %2086
      %2088 = vrot.lane.b32.xlu0 %v1982, 1
      %v2089 = vpop.permute.xlu0 %2088
      %2090 = vrot.lane.b32.xlu0 %v1983, 1
      %v2091 = vpop.permute.xlu0 %2090
      %2092 = vrot.lane.b32.xlu0 %v1984, 1
      %v2093 = vpop.permute.xlu0 %2092
      %2094 = vrot.lane.b32.xlu0 %v1985, 1
      %v2095 = vpop.permute.xlu0 %2094
      %2096 = vrot.lane.b32.xlu0 %v1986, 1
      %v2097 = vpop.permute.xlu0 %2096
      %2098 = vrot.lane.b32.xlu0 %v1987, 1
      %v2099 = vpop.permute.xlu0 %2098
      %2100 = vrot.lane.b32.xlu0 %v1988, 1
      %v2101 = vpop.permute.xlu0 %2100
      %2102 = vrot.lane.b32.xlu0 %v1989, 1
      %v2103 = vpop.permute.xlu0 %2102
      %2104 = vrot.lane.b32.xlu0 %v1990, 1
      %v2105 = vpop.permute.xlu0 %2104
      %2106 = vrot.lane.b32.xlu0 %v1991, 1
      %v2107 = vpop.permute.xlu0 %2106
      %2108 = vrot.lane.b32.xlu0 %v1992, 1
      %v2109 = vpop.permute.xlu0 %2108
      %2110 = vrot.lane.b32.xlu0 %v1993, 1
      %v2111 = vpop.permute.xlu0 %2110
      %2112 = vrot.lane.b32.xlu0 %v1994, 1
      %v2113 = vpop.permute.xlu0 %2112
      %2114 = vrot.lane.b32.xlu0 %v1995, 1
      %v2115 = vpop.permute.xlu0 %2114
      %2116 = vrot.lane.b32.xlu0 %v1996, 1
      %v2117 = vpop.permute.xlu0 %2116
      %2118 = vrot.lane.b32.xlu0 %v1997, 1
      %v2119 = vpop.permute.xlu0 %2118
      %2120 = vrot.lane.b32.xlu0 %v1998, 1
      %v2121 = vpop.permute.xlu0 %2120
      %2122 = vrot.lane.b32.xlu0 %v1999, 1
      %v2123 = vpop.permute.xlu0 %2122
      %2124 = vrot.lane.b32.xlu0 %v2000, 1
      %v2125 = vpop.permute.xlu0 %2124
      %2126 = vrot.lane.b32.xlu0 %v2001, 1
      %v2127 = vpop.permute.xlu0 %2126
      %2128 = vrot.lane.b32.xlu0 %v2002, 1
      %v2129 = vpop.permute.xlu0 %2128
      %2130 = vrot.lane.b32.xlu0 %v2003, 1
      %v2131 = vpop.permute.xlu0 %2130
      %2132 = vrot.lane.b32.xlu0 %v2004, 1
      %v2133 = vpop.permute.xlu0 %2132
      %2134 = vrot.lane.b32.xlu0 %v2005, 1
      %v2135 = vpop.permute.xlu0 %2134
      %2136 = vrot.lane.b32.xlu0 %v2006, 1
      %v2137 = vpop.permute.xlu0 %2136
      %2138 = vrot.lane.b32.xlu0 %v2007, 1
      %v2139 = vpop.permute.xlu0 %2138
      %2140 = vrot.lane.b32.xlu0 %v2008, 1
      %v2141 = vpop.permute.xlu0 %2140
      %2142 = vrot.lane.b32.xlu0 %v2009, 1
      %v2143 = vpop.permute.xlu0 %2142
      %2144 = vrot.lane.b32.xlu0 %v2010, 1
      %v2145 = vpop.permute.xlu0 %2144
      %2146 = vrot.lane.b32.xlu0 %v2011, 1
      %v2147 = vpop.permute.xlu0 %2146
      %2148 = vrot.lane.b32.xlu0 %v2012, 1
      %v2149 = vpop.permute.xlu0 %2148
      %2150 = vrot.lane.b32.xlu0 %v2013, 1
      %v2151 = vpop.permute.xlu0 %2150
      %2152 = vrot.lane.b32.xlu0 %v2014, 1
      %v2153 = vpop.permute.xlu0 %2152
      %2154 = vrot.lane.b32.xlu0 %v2015, 1
      %v2155 = vpop.permute.xlu0 %2154
      %2156 = vrot.lane.b32.xlu0 %v2016, 1
      %v2157 = vpop.permute.xlu0 %2156
      %2158 = vrot.lane.b32.xlu0 %v2017, 1
      %v2159 = vpop.permute.xlu0 %2158
      %2160 = vrot.lane.b32.xlu0 %v2018, 1
      %v2161 = vpop.permute.xlu0 %2160
      %2162 = vrot.lane.b32.xlu0 %v2019, 1
      %v2163 = vpop.permute.xlu0 %2162
      %2164 = vrot.lane.b32.xlu0 %v2020, 1
      %v2165 = vpop.permute.xlu0 %2164
      %2166 = vrot.lane.b32.xlu0 %v2021, 1
      %v2167 = vpop.permute.xlu0 %2166
      %2168 = vrot.lane.b32.xlu0 %v2022, 1
      %v2169 = vpop.permute.xlu0 %2168
      %2170 = vrot.lane.b32.xlu0 %v2023, 1
      %v2171 = vpop.permute.xlu0 %2170
      %2172 = vrot.lane.b32.xlu0 %v2024, 1
      %v2173 = vpop.permute.xlu0 %2172
      %2174 = vrot.lane.b32.xlu0 %v2025, 1
      %v2175 = vpop.permute.xlu0 %2174
      %2176 = vrot.lane.b32.xlu0 %v2026, 1
      %v2177 = vpop.permute.xlu0 %2176
      %2178 = vrot.lane.b32.xlu0 %v2027, 1
      %v2179 = vpop.permute.xlu0 %2178
      %2180 = vrot.lane.b32.xlu0 %v2028, 1
      %v2181 = vpop.permute.xlu0 %2180
      %v2233 = vsub.f32 %v1774, %v2081
      %v2234 = vsub.f32 %v1775, %v2083
      %v2235 = vsub.f32 %v1776, %v2085
      %v2236 = vsub.f32 %v1777, %v2087
      %v2237 = vsub.f32 %v1778, %v2089
      %v2238 = vsub.f32 %v1779, %v2091
      %v2239 = vsub.f32 %v1780, %v2093
      %v2240 = vsub.f32 %v1781, %v2095
      %v2241 = vsub.f32 %v1782, %v2097
      %v2242 = vsub.f32 %v1783, %v2099
      %v2243 = vsub.f32 %v1784, %v2101
      %v2244 = vsub.f32 %v1785, %v2103
      %v2245 = vsub.f32 %v1786, %v2105
      %v2246 = vsub.f32 %v1787, %v2107
      %v2247 = vsub.f32 %v1788, %v2109
      %v2248 = vsub.f32 %v1789, %v2111
      %v2249 = vsub.f32 %v1790, %v2113
      %v2250 = vsub.f32 %v1791, %v2115
      %v2251 = vsub.f32 %v1792, %v2117
      %v2252 = vsub.f32 %v1793, %v2119
      %v2253 = vsub.f32 %v1794, %v2121
      %v2254 = vsub.f32 %v1795, %v2123
      %v2255 = vsub.f32 %v1796, %v2125
      %v2256 = vsub.f32 %v1797, %v2127
      %v2257 = vsub.f32 %v1798, %v2129
      %v2258 = vsub.f32 %v1799, %v2131
      %v2259 = vsub.f32 %v1800, %v2133
      %v2260 = vsub.f32 %v1801, %v2135
      %v2261 = vsub.f32 %v1802, %v2137
      %v2262 = vsub.f32 %v1803, %v2139
      %v2263 = vsub.f32 %v1804, %v2141
      %v2264 = vsub.f32 %v1805, %v2143
      %v2265 = vsub.f32 %v1806, %v2145
      %v2266 = vsub.f32 %v1807, %v2147
      %v2267 = vsub.f32 %v1808, %v2149
      %v2268 = vsub.f32 %v1809, %v2151
      %v2269 = vsub.f32 %v1810, %v2153
      %v2270 = vsub.f32 %v1811, %v2155
      %v2271 = vsub.f32 %v1812, %v2157
      %v2272 = vsub.f32 %v1813, %v2159
      %v2273 = vsub.f32 %v1814, %v2161
      %v2274 = vsub.f32 %v1815, %v2163
      %v2275 = vsub.f32 %v1816, %v2165
      %v2276 = vsub.f32 %v1817, %v2167
      %v2277 = vsub.f32 %v1818, %v2169
      %v2278 = vsub.f32 %v1819, %v2171
      %v2279 = vsub.f32 %v1820, %v2173
      %v2280 = vsub.f32 %v1821, %v2175
      %v2281 = vsub.f32 %v1822, %v2177
      %v2282 = vsub.f32 %v1823, %v2179
      %v2283 = vsub.f32 %v1824, %v2181
      %2285 = vset.pattern.permute.xlu0 0
      %2286 = vperm.xlu0 %2285, %v1927
      %v2287 = vpop.permute.xlu0 %2286
      %2290 = vset.pattern.permute.xlu0 0
      %2291 = vperm.xlu0 %2290, %v1928
      %v2292 = vpop.permute.xlu0 %2291
      %2295 = vset.pattern.permute.xlu0 0
      %2296 = vperm.xlu0 %2295, %v1929
      %v2297 = vpop.permute.xlu0 %2296
      %2300 = vset.pattern.permute.xlu0 0
      %2301 = vperm.xlu0 %2300, %v1930
      %v2302 = vpop.permute.xlu0 %2301
      %2305 = vset.pattern.permute.xlu0 0
      %2306 = vperm.xlu0 %2305, %v1931
      %v2307 = vpop.permute.xlu0 %2306
      %2310 = vset.pattern.permute.xlu0 0
      %2311 = vperm.xlu0 %2310, %v1932
      %v2312 = vpop.permute.xlu0 %2311
      %2315 = vset.pattern.permute.xlu0 0
      %2316 = vperm.xlu0 %2315, %v1933
      %v2317 = vpop.permute.xlu0 %2316
      %2320 = vset.pattern.permute.xlu0 0
      %2321 = vperm.xlu0 %2320, %v1934
      %v2322 = vpop.permute.xlu0 %2321
      %2325 = vset.pattern.permute.xlu0 0
      %2326 = vperm.xlu0 %2325, %v1935
      %v2327 = vpop.permute.xlu0 %2326
      %2330 = vset.pattern.permute.xlu0 0
      %2331 = vperm.xlu0 %2330, %v1936
      %v2332 = vpop.permute.xlu0 %2331
      %2335 = vset.pattern.permute.xlu0 0
      %2336 = vperm.xlu0 %2335, %v1937
      %v2337 = vpop.permute.xlu0 %2336
      %2340 = vset.pattern.permute.xlu0 0
      %2341 = vperm.xlu0 %2340, %v1938
      %v2342 = vpop.permute.xlu0 %2341
      %2345 = vset.pattern.permute.xlu0 0
      %2346 = vperm.xlu0 %2345, %v1939
      %v2347 = vpop.permute.xlu0 %2346
      %2350 = vset.pattern.permute.xlu0 0
      %2351 = vperm.xlu0 %2350, %v1940
      %v2352 = vpop.permute.xlu0 %2351
      %2355 = vset.pattern.permute.xlu0 0
      %2356 = vperm.xlu0 %2355, %v1941
      %v2357 = vpop.permute.xlu0 %2356
      %2360 = vset.pattern.permute.xlu0 0
      %2361 = vperm.xlu0 %2360, %v1942
      %v2362 = vpop.permute.xlu0 %2361
      %2365 = vset.pattern.permute.xlu0 0
      %2366 = vperm.xlu0 %2365, %v1943
      %v2367 = vpop.permute.xlu0 %2366
      %2370 = vset.pattern.permute.xlu0 0
      %2371 = vperm.xlu0 %2370, %v1944
      %v2372 = vpop.permute.xlu0 %2371
      %2375 = vset.pattern.permute.xlu0 0
      %2376 = vperm.xlu0 %2375, %v1945
      %v2377 = vpop.permute.xlu0 %2376
      %2380 = vset.pattern.permute.xlu0 0
      %2381 = vperm.xlu0 %2380, %v1946
      %v2382 = vpop.permute.xlu0 %2381
      %2385 = vset.pattern.permute.xlu0 0
      %2386 = vperm.xlu0 %2385, %v1947
      %v2387 = vpop.permute.xlu0 %2386
      %2390 = vset.pattern.permute.xlu0 0
      %2391 = vperm.xlu0 %2390, %v1948
      %v2392 = vpop.permute.xlu0 %2391
      %2395 = vset.pattern.permute.xlu0 0
      %2396 = vperm.xlu0 %2395, %v1949
      %v2397 = vpop.permute.xlu0 %2396
      %2400 = vset.pattern.permute.xlu0 0
      %2401 = vperm.xlu0 %2400, %v1950
      %v2402 = vpop.permute.xlu0 %2401
      %2405 = vset.pattern.permute.xlu0 0
      %2406 = vperm.xlu0 %2405, %v1951
      %v2407 = vpop.permute.xlu0 %2406
      %2410 = vset.pattern.permute.xlu0 0
      %2411 = vperm.xlu0 %2410, %v1952
      %v2412 = vpop.permute.xlu0 %2411
      %2415 = vset.pattern.permute.xlu0 0
      %2416 = vperm.xlu0 %2415, %v1953
      %v2417 = vpop.permute.xlu0 %2416
      %2420 = vset.pattern.permute.xlu0 0
      %2421 = vperm.xlu0 %2420, %v1954
      %v2422 = vpop.permute.xlu0 %2421
      %2425 = vset.pattern.permute.xlu0 0
      %2426 = vperm.xlu0 %2425, %v1955
      %v2427 = vpop.permute.xlu0 %2426
      %2430 = vset.pattern.permute.xlu0 0
      %2431 = vperm.xlu0 %2430, %v1956
      %v2432 = vpop.permute.xlu0 %2431
      %2435 = vset.pattern.permute.xlu0 0
      %2436 = vperm.xlu0 %2435, %v1957
      %v2437 = vpop.permute.xlu0 %2436
      %2440 = vset.pattern.permute.xlu0 0
      %2441 = vperm.xlu0 %2440, %v1958
      %v2442 = vpop.permute.xlu0 %2441
      %2445 = vset.pattern.permute.xlu0 0
      %2446 = vperm.xlu0 %2445, %v1959
      %v2447 = vpop.permute.xlu0 %2446
      %2450 = vset.pattern.permute.xlu0 0
      %2451 = vperm.xlu0 %2450, %v1960
      %v2452 = vpop.permute.xlu0 %2451
      %2455 = vset.pattern.permute.xlu0 0
      %2456 = vperm.xlu0 %2455, %v1961
      %v2457 = vpop.permute.xlu0 %2456
      %2460 = vset.pattern.permute.xlu0 0
      %2461 = vperm.xlu0 %2460, %v1962
      %v2462 = vpop.permute.xlu0 %2461
      %2465 = vset.pattern.permute.xlu0 0
      %2466 = vperm.xlu0 %2465, %v1963
      %v2467 = vpop.permute.xlu0 %2466
      %2470 = vset.pattern.permute.xlu0 0
      %2471 = vperm.xlu0 %2470, %v1964
      %v2472 = vpop.permute.xlu0 %2471
      %2475 = vset.pattern.permute.xlu0 0
      %2476 = vperm.xlu0 %2475, %v1965
      %v2477 = vpop.permute.xlu0 %2476
      %2480 = vset.pattern.permute.xlu0 0
      %2481 = vperm.xlu0 %2480, %v1966
      %v2482 = vpop.permute.xlu0 %2481
      %2485 = vset.pattern.permute.xlu0 0
      %2486 = vperm.xlu0 %2485, %v1967
      %v2487 = vpop.permute.xlu0 %2486
      %2490 = vset.pattern.permute.xlu0 0
      %2491 = vperm.xlu0 %2490, %v1968
      %v2492 = vpop.permute.xlu0 %2491
      %2495 = vset.pattern.permute.xlu0 0
      %2496 = vperm.xlu0 %2495, %v1969
      %v2497 = vpop.permute.xlu0 %2496
      %2500 = vset.pattern.permute.xlu0 0
      %2501 = vperm.xlu0 %2500, %v1970
      %v2502 = vpop.permute.xlu0 %2501
      %2505 = vset.pattern.permute.xlu0 0
      %2506 = vperm.xlu0 %2505, %v1971
      %v2507 = vpop.permute.xlu0 %2506
      %2510 = vset.pattern.permute.xlu0 0
      %2511 = vperm.xlu0 %2510, %v1972
      %v2512 = vpop.permute.xlu0 %2511
      %2515 = vset.pattern.permute.xlu0 0
      %2516 = vperm.xlu0 %2515, %v1973
      %v2517 = vpop.permute.xlu0 %2516
      %2520 = vset.pattern.permute.xlu0 0
      %2521 = vperm.xlu0 %2520, %v1974
      %v2522 = vpop.permute.xlu0 %2521
      %2525 = vset.pattern.permute.xlu0 0
      %2526 = vperm.xlu0 %2525, %v1975
      %v2527 = vpop.permute.xlu0 %2526
      %2530 = vset.pattern.permute.xlu0 0
      %2531 = vperm.xlu0 %2530, %v1976
      %v2532 = vpop.permute.xlu0 %2531
      %2535 = vset.pattern.permute.xlu0 0
      %2536 = vperm.xlu0 %2535, %v1977
      %v2537 = vpop.permute.xlu0 %2536
      %v2539 = vmul.f32 %v752, %v2287
      %v2540 = vmul.f32 %v754, %v2287
      %v2541 = vmul.f32 %v756, %v2292
      %v2542 = vmul.f32 %v758, %v2292
      %v2543 = vmul.f32 %v762, %v2297
      %v2544 = vmul.f32 %v764, %v2297
      %v2545 = vmul.f32 %v766, %v2302
      %v2546 = vmul.f32 %v768, %v2302
      %v2547 = vmul.f32 %v772, %v2307
      %v2548 = vmul.f32 %v774, %v2307
      %v2549 = vmul.f32 %v776, %v2312
      %v2550 = vmul.f32 %v778, %v2312
      %v2551 = vmul.f32 %v782, %v2317
      %v2552 = vmul.f32 %v784, %v2317
      %v2553 = vmul.f32 %v786, %v2322
      %v2554 = vmul.f32 %v788, %v2322
      %v2555 = vmul.f32 %v792, %v2327
      %v2556 = vmul.f32 %v794, %v2327
      %v2557 = vmul.f32 %v796, %v2332
      %v2558 = vmul.f32 %v798, %v2332
      %v2559 = vmul.f32 %v802, %v2337
      %v2560 = vmul.f32 %v804, %v2337
      %v2561 = vmul.f32 %v806, %v2342
      %v2562 = vmul.f32 %v808, %v2342
      %v2563 = vmul.f32 %v812, %v2347
      %v2564 = vmul.f32 %v814, %v2347
      %v2565 = vmul.f32 %v816, %v2352
      %v2566 = vmul.f32 %v818, %v2352
      %v2567 = vmul.f32 %v822, %v2357
      %v2568 = vmul.f32 %v824, %v2357
      %v2569 = vmul.f32 %v826, %v2362
      %v2570 = vmul.f32 %v828, %v2362
      %v2571 = vmul.f32 %v832, %v2367
      %v2572 = vmul.f32 %v834, %v2367
      %v2573 = vmul.f32 %v836, %v2372
      %v2574 = vmul.f32 %v838, %v2372
      %v2575 = vmul.f32 %v842, %v2377
      %v2576 = vmul.f32 %v844, %v2377
      %v2577 = vmul.f32 %v846, %v2382
      %v2578 = vmul.f32 %v848, %v2382
      %v2579 = vmul.f32 %v852, %v2387
      %v2580 = vmul.f32 %v854, %v2387
      %v2581 = vmul.f32 %v856, %v2392
      %v2582 = vmul.f32 %v858, %v2392
      %v2583 = vmul.f32 %v862, %v2397
      %v2584 = vmul.f32 %v864, %v2397
      %v2585 = vmul.f32 %v866, %v2402
      %v2586 = vmul.f32 %v868, %v2402
      %v2587 = vmul.f32 %v872, %v2407
      %v2588 = vmul.f32 %v874, %v2407
      %v2589 = vmul.f32 %v876, %v2412
      %v2590 = vmul.f32 %v878, %v2412
      %v2591 = vmul.f32 %v882, %v2417
      %v2592 = vmul.f32 %v884, %v2417
      %v2593 = vmul.f32 %v886, %v2422
      %v2594 = vmul.f32 %v888, %v2422
      %v2595 = vmul.f32 %v892, %v2427
      %v2596 = vmul.f32 %v894, %v2427
      %v2597 = vmul.f32 %v896, %v2432
      %v2598 = vmul.f32 %v898, %v2432
      %v2599 = vmul.f32 %v902, %v2437
      %v2600 = vmul.f32 %v904, %v2437
      %v2601 = vmul.f32 %v906, %v2442
      %v2602 = vmul.f32 %v908, %v2442
      %v2603 = vmul.f32 %v912, %v2447
      %v2604 = vmul.f32 %v914, %v2447
      %v2605 = vmul.f32 %v916, %v2452
      %v2606 = vmul.f32 %v918, %v2452
      %v2607 = vmul.f32 %v922, %v2457
      %v2608 = vmul.f32 %v924, %v2457
      %v2609 = vmul.f32 %v926, %v2462
      %v2610 = vmul.f32 %v928, %v2462
      %v2611 = vmul.f32 %v932, %v2467
      %v2612 = vmul.f32 %v934, %v2467
      %v2613 = vmul.f32 %v936, %v2472
      %v2614 = vmul.f32 %v938, %v2472
      %v2615 = vmul.f32 %v942, %v2477
      %v2616 = vmul.f32 %v944, %v2477
      %v2617 = vmul.f32 %v946, %v2482
      %v2618 = vmul.f32 %v948, %v2482
      %v2619 = vmul.f32 %v952, %v2487
      %v2620 = vmul.f32 %v954, %v2487
      %v2621 = vmul.f32 %v956, %v2492
      %v2622 = vmul.f32 %v958, %v2492
      %v2623 = vmul.f32 %v962, %v2497
      %v2624 = vmul.f32 %v964, %v2497
      %v2625 = vmul.f32 %v966, %v2502
      %v2626 = vmul.f32 %v968, %v2502
      %v2627 = vmul.f32 %v972, %v2507
      %v2628 = vmul.f32 %v974, %v2507
      %v2629 = vmul.f32 %v976, %v2512
      %v2630 = vmul.f32 %v978, %v2512
      %v2631 = vmul.f32 %v982, %v2517
      %v2632 = vmul.f32 %v984, %v2517
      %v2633 = vmul.f32 %v986, %v2522
      %v2634 = vmul.f32 %v988, %v2522
      %v2635 = vmul.f32 %v992, %v2527
      %v2636 = vmul.f32 %v994, %v2527
      %v2637 = vmul.f32 %v996, %v2532
      %v2638 = vmul.f32 %v998, %v2532
      %v2639 = vmul.f32 %v1002, %v2537
      %v2640 = vmul.f32 %v1004, %v2537
      %2642 = vset.pattern.permute.xlu0 1
      %2643 = vperm.xlu0 %2642, %v2233
      %v2644 = vpop.permute.xlu0 %2643
      %2647 = vset.pattern.permute.xlu0 1
      %2648 = vperm.xlu0 %2647, %v2234
      %v2649 = vpop.permute.xlu0 %2648
      %2652 = vset.pattern.permute.xlu0 1
      %2653 = vperm.xlu0 %2652, %v2235
      %v2654 = vpop.permute.xlu0 %2653
      %2657 = vset.pattern.permute.xlu0 1
      %2658 = vperm.xlu0 %2657, %v2236
      %v2659 = vpop.permute.xlu0 %2658
      %2662 = vset.pattern.permute.xlu0 1
      %2663 = vperm.xlu0 %2662, %v2237
      %v2664 = vpop.permute.xlu0 %2663
      %2667 = vset.pattern.permute.xlu0 1
      %2668 = vperm.xlu0 %2667, %v2238
      %v2669 = vpop.permute.xlu0 %2668
      %2672 = vset.pattern.permute.xlu0 1
      %2673 = vperm.xlu0 %2672, %v2239
      %v2674 = vpop.permute.xlu0 %2673
      %2677 = vset.pattern.permute.xlu0 1
      %2678 = vperm.xlu0 %2677, %v2240
      %v2679 = vpop.permute.xlu0 %2678
      %2682 = vset.pattern.permute.xlu0 1
      %2683 = vperm.xlu0 %2682, %v2241
      %v2684 = vpop.permute.xlu0 %2683
      %2687 = vset.pattern.permute.xlu0 1
      %2688 = vperm.xlu0 %2687, %v2242
      %v2689 = vpop.permute.xlu0 %2688
      %2692 = vset.pattern.permute.xlu0 1
      %2693 = vperm.xlu0 %2692, %v2243
      %v2694 = vpop.permute.xlu0 %2693
      %2697 = vset.pattern.permute.xlu0 1
      %2698 = vperm.xlu0 %2697, %v2244
      %v2699 = vpop.permute.xlu0 %2698
      %2702 = vset.pattern.permute.xlu0 1
      %2703 = vperm.xlu0 %2702, %v2245
      %v2704 = vpop.permute.xlu0 %2703
      %2707 = vset.pattern.permute.xlu0 1
      %2708 = vperm.xlu0 %2707, %v2246
      %v2709 = vpop.permute.xlu0 %2708
      %2712 = vset.pattern.permute.xlu0 1
      %2713 = vperm.xlu0 %2712, %v2247
      %v2714 = vpop.permute.xlu0 %2713
      %2717 = vset.pattern.permute.xlu0 1
      %2718 = vperm.xlu0 %2717, %v2248
      %v2719 = vpop.permute.xlu0 %2718
      %2722 = vset.pattern.permute.xlu0 1
      %2723 = vperm.xlu0 %2722, %v2249
      %v2724 = vpop.permute.xlu0 %2723
      %2727 = vset.pattern.permute.xlu0 1
      %2728 = vperm.xlu0 %2727, %v2250
      %v2729 = vpop.permute.xlu0 %2728
      %2732 = vset.pattern.permute.xlu0 1
      %2733 = vperm.xlu0 %2732, %v2251
      %v2734 = vpop.permute.xlu0 %2733
      %2737 = vset.pattern.permute.xlu0 1
      %2738 = vperm.xlu0 %2737, %v2252
      %v2739 = vpop.permute.xlu0 %2738
      %2742 = vset.pattern.permute.xlu0 1
      %2743 = vperm.xlu0 %2742, %v2253
      %v2744 = vpop.permute.xlu0 %2743
      %2747 = vset.pattern.permute.xlu0 1
      %2748 = vperm.xlu0 %2747, %v2254
      %v2749 = vpop.permute.xlu0 %2748
      %2752 = vset.pattern.permute.xlu0 1
      %2753 = vperm.xlu0 %2752, %v2255
      %v2754 = vpop.permute.xlu0 %2753
      %2757 = vset.pattern.permute.xlu0 1
      %2758 = vperm.xlu0 %2757, %v2256
      %v2759 = vpop.permute.xlu0 %2758
      %2762 = vset.pattern.permute.xlu0 1
      %2763 = vperm.xlu0 %2762, %v2257
      %v2764 = vpop.permute.xlu0 %2763
      %2767 = vset.pattern.permute.xlu0 1
      %2768 = vperm.xlu0 %2767, %v2258
      %v2769 = vpop.permute.xlu0 %2768
      %2772 = vset.pattern.permute.xlu0 1
      %2773 = vperm.xlu0 %2772, %v2259
      %v2774 = vpop.permute.xlu0 %2773
      %2777 = vset.pattern.permute.xlu0 1
      %2778 = vperm.xlu0 %2777, %v2260
      %v2779 = vpop.permute.xlu0 %2778
      %2782 = vset.pattern.permute.xlu0 1
      %2783 = vperm.xlu0 %2782, %v2261
      %v2784 = vpop.permute.xlu0 %2783
      %2787 = vset.pattern.permute.xlu0 1
      %2788 = vperm.xlu0 %2787, %v2262
      %v2789 = vpop.permute.xlu0 %2788
      %2792 = vset.pattern.permute.xlu0 1
      %2793 = vperm.xlu0 %2792, %v2263
      %v2794 = vpop.permute.xlu0 %2793
      %2797 = vset.pattern.permute.xlu0 1
      %2798 = vperm.xlu0 %2797, %v2264
      %v2799 = vpop.permute.xlu0 %2798
      %2802 = vset.pattern.permute.xlu0 1
      %2803 = vperm.xlu0 %2802, %v2265
      %v2804 = vpop.permute.xlu0 %2803
      %2807 = vset.pattern.permute.xlu0 1
      %2808 = vperm.xlu0 %2807, %v2266
      %v2809 = vpop.permute.xlu0 %2808
      %2812 = vset.pattern.permute.xlu0 1
      %2813 = vperm.xlu0 %2812, %v2267
      %v2814 = vpop.permute.xlu0 %2813
      %2817 = vset.pattern.permute.xlu0 1
      %2818 = vperm.xlu0 %2817, %v2268
      %v2819 = vpop.permute.xlu0 %2818
      %2822 = vset.pattern.permute.xlu0 1
      %2823 = vperm.xlu0 %2822, %v2269
      %v2824 = vpop.permute.xlu0 %2823
      %2827 = vset.pattern.permute.xlu0 1
      %2828 = vperm.xlu0 %2827, %v2270
      %v2829 = vpop.permute.xlu0 %2828
      %2832 = vset.pattern.permute.xlu0 1
      %2833 = vperm.xlu0 %2832, %v2271
      %v2834 = vpop.permute.xlu0 %2833
      %2837 = vset.pattern.permute.xlu0 1
      %2838 = vperm.xlu0 %2837, %v2272
      %v2839 = vpop.permute.xlu0 %2838
      %2842 = vset.pattern.permute.xlu0 1
      %2843 = vperm.xlu0 %2842, %v2273
      %v2844 = vpop.permute.xlu0 %2843
      %2847 = vset.pattern.permute.xlu0 1
      %2848 = vperm.xlu0 %2847, %v2274
      %v2849 = vpop.permute.xlu0 %2848
      %2852 = vset.pattern.permute.xlu0 1
      %2853 = vperm.xlu0 %2852, %v2275
      %v2854 = vpop.permute.xlu0 %2853
      %2857 = vset.pattern.permute.xlu0 1
      %2858 = vperm.xlu0 %2857, %v2276
      %v2859 = vpop.permute.xlu0 %2858
      %2862 = vset.pattern.permute.xlu0 1
      %2863 = vperm.xlu0 %2862, %v2277
      %v2864 = vpop.permute.xlu0 %2863
      %2867 = vset.pattern.permute.xlu0 1
      %2868 = vperm.xlu0 %2867, %v2278
      %v2869 = vpop.permute.xlu0 %2868
      %2872 = vset.pattern.permute.xlu0 1
      %2873 = vperm.xlu0 %2872, %v2279
      %v2874 = vpop.permute.xlu0 %2873
      %2877 = vset.pattern.permute.xlu0 1
      %2878 = vperm.xlu0 %2877, %v2280
      %v2879 = vpop.permute.xlu0 %2878
      %2882 = vset.pattern.permute.xlu0 1
      %2883 = vperm.xlu0 %2882, %v2281
      %v2884 = vpop.permute.xlu0 %2883
      %2887 = vset.pattern.permute.xlu0 1
      %2888 = vperm.xlu0 %2887, %v2282
      %v2889 = vpop.permute.xlu0 %2888
      %2892 = vset.pattern.permute.xlu0 1
      %2893 = vperm.xlu0 %2892, %v2283
      %v2894 = vpop.permute.xlu0 %2893
      %v2896 = vadd.f32 %v2539, %v2644
      %v2897 = vadd.f32 %v2540, %v2644
      %v2898 = vadd.f32 %v2541, %v2649
      %v2899 = vadd.f32 %v2542, %v2649
      %v2900 = vadd.f32 %v2543, %v2654
      %v2901 = vadd.f32 %v2544, %v2654
      %v2902 = vadd.f32 %v2545, %v2659
      %v2903 = vadd.f32 %v2546, %v2659
      %v2904 = vadd.f32 %v2547, %v2664
      %v2905 = vadd.f32 %v2548, %v2664
      %v2906 = vadd.f32 %v2549, %v2669
      %v2907 = vadd.f32 %v2550, %v2669
      %v2908 = vadd.f32 %v2551, %v2674
      %v2909 = vadd.f32 %v2552, %v2674
      %v2910 = vadd.f32 %v2553, %v2679
      %v2911 = vadd.f32 %v2554, %v2679
      %v2912 = vadd.f32 %v2555, %v2684
      %v2913 = vadd.f32 %v2556, %v2684
      %v2914 = vadd.f32 %v2557, %v2689
      %v2915 = vadd.f32 %v2558, %v2689
      %v2916 = vadd.f32 %v2559, %v2694
      %v2917 = vadd.f32 %v2560, %v2694
      %v2918 = vadd.f32 %v2561, %v2699
      %v2919 = vadd.f32 %v2562, %v2699
      %v2920 = vadd.f32 %v2563, %v2704
      %v2921 = vadd.f32 %v2564, %v2704
      %v2922 = vadd.f32 %v2565, %v2709
      %v2923 = vadd.f32 %v2566, %v2709
      %v2924 = vadd.f32 %v2567, %v2714
      %v2925 = vadd.f32 %v2568, %v2714
      %v2926 = vadd.f32 %v2569, %v2719
      %v2927 = vadd.f32 %v2570, %v2719
      %v2928 = vadd.f32 %v2571, %v2724
      %v2929 = vadd.f32 %v2572, %v2724
      %v2930 = vadd.f32 %v2573, %v2729
      %v2931 = vadd.f32 %v2574, %v2729
      %v2932 = vadd.f32 %v2575, %v2734
      %v2933 = vadd.f32 %v2576, %v2734
      %v2934 = vadd.f32 %v2577, %v2739
      %v2935 = vadd.f32 %v2578, %v2739
      %v2936 = vadd.f32 %v2579, %v2744
      %v2937 = vadd.f32 %v2580, %v2744
      %v2938 = vadd.f32 %v2581, %v2749
      %v2939 = vadd.f32 %v2582, %v2749
      %v2940 = vadd.f32 %v2583, %v2754
      %v2941 = vadd.f32 %v2584, %v2754
      %v2942 = vadd.f32 %v2585, %v2759
      %v2943 = vadd.f32 %v2586, %v2759
      %v2944 = vadd.f32 %v2587, %v2764
      %v2945 = vadd.f32 %v2588, %v2764
      %v2946 = vadd.f32 %v2589, %v2769
      %v2947 = vadd.f32 %v2590, %v2769
      %v2948 = vadd.f32 %v2591, %v2774
      %v2949 = vadd.f32 %v2592, %v2774
      %v2950 = vadd.f32 %v2593, %v2779
      %v2951 = vadd.f32 %v2594, %v2779
      %v2952 = vadd.f32 %v2595, %v2784
      %v2953 = vadd.f32 %v2596, %v2784
      %v2954 = vadd.f32 %v2597, %v2789
      %v2955 = vadd.f32 %v2598, %v2789
      %v2956 = vadd.f32 %v2599, %v2794
      %v2957 = vadd.f32 %v2600, %v2794
      %v2958 = vadd.f32 %v2601, %v2799
      %v2959 = vadd.f32 %v2602, %v2799
      %v2960 = vadd.f32 %v2603, %v2804
      %v2961 = vadd.f32 %v2604, %v2804
      %v2962 = vadd.f32 %v2605, %v2809
      %v2963 = vadd.f32 %v2606, %v2809
      %v2964 = vadd.f32 %v2607, %v2814
      %v2965 = vadd.f32 %v2608, %v2814
      %v2966 = vadd.f32 %v2609, %v2819
      %v2967 = vadd.f32 %v2610, %v2819
      %v2968 = vadd.f32 %v2611, %v2824
      %v2969 = vadd.f32 %v2612, %v2824
      %v2970 = vadd.f32 %v2613, %v2829
      %v2971 = vadd.f32 %v2614, %v2829
      %v2972 = vadd.f32 %v2615, %v2834
      %v2973 = vadd.f32 %v2616, %v2834
      %v2974 = vadd.f32 %v2617, %v2839
      %v2975 = vadd.f32 %v2618, %v2839
      %v2976 = vadd.f32 %v2619, %v2844
      %v2977 = vadd.f32 %v2620, %v2844
      %v2978 = vadd.f32 %v2621, %v2849
      %v2979 = vadd.f32 %v2622, %v2849
      %v2980 = vadd.f32 %v2623, %v2854
      %v2981 = vadd.f32 %v2624, %v2854
      %v2982 = vadd.f32 %v2625, %v2859
      %v2983 = vadd.f32 %v2626, %v2859
      %v2984 = vadd.f32 %v2627, %v2864
      %v2985 = vadd.f32 %v2628, %v2864
      %v2986 = vadd.f32 %v2629, %v2869
      %v2987 = vadd.f32 %v2630, %v2869
      %v2988 = vadd.f32 %v2631, %v2874
      %v2989 = vadd.f32 %v2632, %v2874
      %v2990 = vadd.f32 %v2633, %v2879
      %v2991 = vadd.f32 %v2634, %v2879
      %v2992 = vadd.f32 %v2635, %v2884
      %v2993 = vadd.f32 %v2636, %v2884
      %v2994 = vadd.f32 %v2637, %v2889
      %v2995 = vadd.f32 %v2638, %v2889
      %v2996 = vadd.f32 %v2639, %v2894
      %v2997 = vadd.f32 %v2640, %v2894
      %2998 = vst [vmem:[%s226] sm:$0xff] %v2896
      %2999 = vst.msk [vmem:[%s226 + $0x8] sm:$0xff] %vm1008, %v2897
      %3000 = vst [vmem:[%s226 + $0x10] sm:$0xff] %v2898
      %3001 = vst.msk [vmem:[%s226 + $0x18] sm:$0xff] %vm1008, %v2899
      %3002 = vst [vmem:[%s226 + $0x20] sm:$0xff] %v2900
      %3003 = vst.msk [vmem:[%s226 + $0x28] sm:$0xff] %vm1008, %v2901
      %3004 = vst [vmem:[%s226 + $0x30] sm:$0xff] %v2902
      %3005 = vst.msk [vmem:[%s226 + $0x38] sm:$0xff] %vm1008, %v2903
      %3006 = vst [vmem:[%s226 + $0x40] sm:$0xff] %v2904
      %3007 = vst.msk [vmem:[%s226 + $0x48] sm:$0xff] %vm1008, %v2905
      %3008 = vst [vmem:[%s226 + $0x50] sm:$0xff] %v2906
      %3009 = vst.msk [vmem:[%s226 + $0x58] sm:$0xff] %vm1008, %v2907
      %3010 = vst [vmem:[%s226 + $0x60] sm:$0xff] %v2908
      %3011 = vst.msk [vmem:[%s226 + $0x68] sm:$0xff] %vm1008, %v2909
      %3012 = vst [vmem:[%s226 + $0x70] sm:$0xff] %v2910
      %3013 = vst.msk [vmem:[%s226 + $0x78] sm:$0xff] %vm1008, %v2911
      %3014 = vst [vmem:[%s226 + $0x80] sm:$0xff] %v2912
      %3015 = vst.msk [vmem:[%s226 + $0x88] sm:$0xff] %vm1008, %v2913
      %3016 = vst [vmem:[%s226 + $0x90] sm:$0xff] %v2914
      %3017 = vst.msk [vmem:[%s226 + $0x98] sm:$0xff] %vm1008, %v2915
      %3018 = vst [vmem:[%s226 + $0xa0] sm:$0xff] %v2916
      %3019 = vst.msk [vmem:[%s226 + $0xa8] sm:$0xff] %vm1008, %v2917
      %3020 = vst [vmem:[%s226 + $0xb0] sm:$0xff] %v2918
      %3021 = vst.msk [vmem:[%s226 + $0xb8] sm:$0xff] %vm1008, %v2919
      %3022 = vst [vmem:[%s226 + $0xc0] sm:$0xff] %v2920
      %3023 = vst.msk [vmem:[%s226 + $0xc8] sm:$0xff] %vm1008, %v2921
      %3024 = vst [vmem:[%s226 + $0xd0] sm:$0xff] %v2922
      %3025 = vst.msk [vmem:[%s226 + $0xd8] sm:$0xff] %vm1008, %v2923
      %3026 = vst [vmem:[%s226 + $0xe0] sm:$0xff] %v2924
      %3027 = vst.msk [vmem:[%s226 + $0xe8] sm:$0xff] %vm1008, %v2925
      %3028 = vst [vmem:[%s226 + $0xf0] sm:$0xff] %v2926
      %3029 = vst.msk [vmem:[%s226 + $0xf8] sm:$0xff] %vm1008, %v2927
      %3030 = vst [vmem:[%s226 + $0x100] sm:$0xff] %v2928
      %3031 = vst.msk [vmem:[%s226 + $0x108] sm:$0xff] %vm1008, %v2929
      %3032 = vst [vmem:[%s226 + $0x110] sm:$0xff] %v2930
      %3033 = vst.msk [vmem:[%s226 + $0x118] sm:$0xff] %vm1008, %v2931
      %3034 = vst [vmem:[%s226 + $0x120] sm:$0xff] %v2932
      %3035 = vst.msk [vmem:[%s226 + $0x128] sm:$0xff] %vm1008, %v2933
      %3036 = vst [vmem:[%s226 + $0x130] sm:$0xff] %v2934
      %3037 = vst.msk [vmem:[%s226 + $0x138] sm:$0xff] %vm1008, %v2935
      %3038 = vst [vmem:[%s226 + $0x140] sm:$0xff] %v2936
      %3039 = vst.msk [vmem:[%s226 + $0x148] sm:$0xff] %vm1008, %v2937
      %3040 = vst [vmem:[%s226 + $0x150] sm:$0xff] %v2938
      %3041 = vst.msk [vmem:[%s226 + $0x158] sm:$0xff] %vm1008, %v2939
      %3042 = vst [vmem:[%s226 + $0x160] sm:$0xff] %v2940
      %3043 = vst.msk [vmem:[%s226 + $0x168] sm:$0xff] %vm1008, %v2941
      %3044 = vst [vmem:[%s226 + $0x170] sm:$0xff] %v2942
      %3045 = vst.msk [vmem:[%s226 + $0x178] sm:$0xff] %vm1008, %v2943
      %3046 = vst [vmem:[%s226 + $0x180] sm:$0xff] %v2944
      %3047 = vst.msk [vmem:[%s226 + $0x188] sm:$0xff] %vm1008, %v2945
      %3048 = vst [vmem:[%s226 + $0x190] sm:$0xff] %v2946
      %3049 = vst.msk [vmem:[%s226 + $0x198] sm:$0xff] %vm1008, %v2947
      %3050 = vst [vmem:[%s226 + $0x1a0] sm:$0xff] %v2948
      %3051 = vst.msk [vmem:[%s226 + $0x1a8] sm:$0xff] %vm1008, %v2949
      %3052 = vst [vmem:[%s226 + $0x1b0] sm:$0xff] %v2950
      %3053 = vst.msk [vmem:[%s226 + $0x1b8] sm:$0xff] %vm1008, %v2951
      %3054 = vst [vmem:[%s226 + $0x1c0] sm:$0xff] %v2952
      %3055 = vst.msk [vmem:[%s226 + $0x1c8] sm:$0xff] %vm1008, %v2953
      %3056 = vst [vmem:[%s226 + $0x1d0] sm:$0xff] %v2954
      %3057 = vst.msk [vmem:[%s226 + $0x1d8] sm:$0xff] %vm1008, %v2955
      %3058 = vst [vmem:[%s226 + $0x1e0] sm:$0xff] %v2956
      %3059 = vst.msk [vmem:[%s226 + $0x1e8] sm:$0xff] %vm1008, %v2957
      %3060 = vst [vmem:[%s226 + $0x1f0] sm:$0xff] %v2958
      %3061 = vst.msk [vmem:[%s226 + $0x1f8] sm:$0xff] %vm1008, %v2959
      %3062 = vst [vmem:[%s226 + $0x200] sm:$0xff] %v2960
      %3063 = vst.msk [vmem:[%s226 + $0x208] sm:$0xff] %vm1008, %v2961
      %3064 = vst [vmem:[%s226 + $0x210] sm:$0xff] %v2962
      %3065 = vst.msk [vmem:[%s226 + $0x218] sm:$0xff] %vm1008, %v2963
      %3066 = vst [vmem:[%s226 + $0x220] sm:$0xff] %v2964
      %3067 = vst.msk [vmem:[%s226 + $0x228] sm:$0xff] %vm1008, %v2965
      %3068 = vst [vmem:[%s226 + $0x230] sm:$0xff] %v2966
      %3069 = vst.msk [vmem:[%s226 + $0x238] sm:$0xff] %vm1008, %v2967
      %3070 = vst [vmem:[%s226 + $0x240] sm:$0xff] %v2968
      %3071 = vst.msk [vmem:[%s226 + $0x248] sm:$0xff] %vm1008, %v2969
      %3072 = vst [vmem:[%s226 + $0x250] sm:$0xff] %v2970
      %3073 = vst.msk [vmem:[%s226 + $0x258] sm:$0xff] %vm1008, %v2971
      %3074 = vst [vmem:[%s226 + $0x260] sm:$0xff] %v2972
      %3075 = vst.msk [vmem:[%s226 + $0x268] sm:$0xff] %vm1008, %v2973
      %3076 = vst [vmem:[%s226 + $0x270] sm:$0xff] %v2974
      %3077 = vst.msk [vmem:[%s226 + $0x278] sm:$0xff] %vm1008, %v2975
      %3078 = vst [vmem:[%s226 + $0x280] sm:$0xff] %v2976
      %3079 = vst.msk [vmem:[%s226 + $0x288] sm:$0xff] %vm1008, %v2977
      %3080 = vst [vmem:[%s226 + $0x290] sm:$0xff] %v2978
      %3081 = vst.msk [vmem:[%s226 + $0x298] sm:$0xff] %vm1008, %v2979
      %3082 = vst [vmem:[%s226 + $0x2a0] sm:$0xff] %v2980
      %3083 = vst.msk [vmem:[%s226 + $0x2a8] sm:$0xff] %vm1008, %v2981
      %3084 = vst [vmem:[%s226 + $0x2b0] sm:$0xff] %v2982
      %3085 = vst.msk [vmem:[%s226 + $0x2b8] sm:$0xff] %vm1008, %v2983
      %3086 = vst [vmem:[%s226 + $0x2c0] sm:$0xff] %v2984
      %3087 = vst.msk [vmem:[%s226 + $0x2c8] sm:$0xff] %vm1008, %v2985
      %3088 = vst [vmem:[%s226 + $0x2d0] sm:$0xff] %v2986
      %3089 = vst.msk [vmem:[%s226 + $0x2d8] sm:$0xff] %vm1008, %v2987
      %3090 = vst [vmem:[%s226 + $0x2e0] sm:$0xff] %v2988
      %3091 = vst.msk [vmem:[%s226 + $0x2e8] sm:$0xff] %vm1008, %v2989
      %3092 = vst [vmem:[%s226 + $0x2f0] sm:$0xff] %v2990
      %3093 = vst.msk [vmem:[%s226 + $0x2f8] sm:$0xff] %vm1008, %v2991
      %3094 = vst [vmem:[%s226 + $0x300] sm:$0xff] %v2992
      %3095 = vst.msk [vmem:[%s226 + $0x308] sm:$0xff] %vm1008, %v2993
      %3096 = vst [vmem:[%s226 + $0x310] sm:$0xff] %v2994
      %3097 = vst.msk [vmem:[%s226 + $0x318] sm:$0xff] %vm1008, %v2995
      %3098 = vst [vmem:[%s226 + $0x320] sm:$0xff] %v2996
      %3099 = vst.msk [vmem:[%s226 + $0x328] sm:$0xff] %vm1008, %v2997
      %s3100 = smul.u32 51, %s15
      %p3101 = scmp.lt.s32.totalorder %s3100, 101
      %s3102 = scalar_select %p3101, %s3100, 101
      %s3103 = smul.addr %s3102, 2
      %s3104 = smul.addr %s3103, 8
      %s3105 = scalar_lea.vmem %s4, %s3104
      // Predicated region
      $region37: #{tpu_custom_call.1} parent=35 // pred_check
        %p3106 = pneg %p127
      $region38: #{tpu_custom_call.1} parent=35 // pred_check_branch
        %3108 = sbr.rel (%p3106) target = $region40
      $region39: #{tpu_custom_call.1} parent=35 // pred_region
        %s3109 = smul.u32 51, %s15
      $region40: #{tpu_custom_call.1} parent=35 // pred_fallthru
        _
    $region36: #{tpu_custom_call.1} parent=5 // pred_fallthru
      _
    %p3110 = scmp.le.s32.totalorder 2, %s10
    // Predicated region
    $region41: #{tpu_custom_call.1} parent=5 // pred_check
      %p3111 = pneg %p3110
    $region42: #{tpu_custom_call.1} parent=5 // pred_check_branch
      %3113 = sbr.rel (%p3111) target = $region44
    $region43: #{tpu_custom_call.1} parent=5 // pred_region
      %s3114 = ssub.s32 %s10, 2
      // Predicated region
      $region45: #{tpu_custom_call.1} parent=43 // pred_check
        %p3115 = pneg %p133
      $region46: #{tpu_custom_call.1} parent=43 // pred_check_branch
        %3117 = sbr.rel (%p3115) target = $region48
      $region47: #{tpu_custom_call.1} parent=43 // pred_region
        %s3118 = smul.u32 51, %s16
        %p3119 = scmp.lt.s32.totalorder %s3118, 101
        %s3120 = scalar_select %p3119, %s3118, 101
        %s3121 = smul.addr %s3120, 2
        %s3122 = smul.addr %s3121, 8
        %s3123 = scalar_lea.vmem %s4, %s3122
      $region48: #{tpu_custom_call.1} parent=43 // pred_fallthru
        _
    $region44: #{tpu_custom_call.1} parent=5 // pred_fallthru
      _
  $region6: #{tpu_custom_call.1} parent=0 // loop_footer
    %s14 = sadd.s32 1, %s10
  $region7: #{tpu_custom_call.1} parent=0 // loop_footer_branch
    %9 = sbr.rel target = $region3
  $region8: #{tpu_custom_call.1} parent=0 // loop_exit
    _

</llo_original>
